<compile_context>
chip_gen: v7x
topology: tpu7x:2x2x1
jax: 0.10.0
libtpu: 0.0.40
codegen_flags: <defaults>
</compile_context>

<pallas_src>
import jax
import jax.numpy as jnp
from jax.experimental import pallas as pl
from jax.experimental.pallas import tpu as pltpu


def _round_up(v, m):
    return (v + m - 1) // m * m


def _make_kernel(Bt, H, W, Cin, width, Cout, Hp, Wp, use_cat3):
    L = H * Wp            # frame rows carrying conv2 outputs (incl. junk cols)
    F = Hp * Wp           # total rows in the zero-padded frame
    Ls = L + 2 * Wp       # rows needed to cover every (ky, kx) tap

    def kernel(x_ref, w1_ref, b1_ref, w2_ref, b2_ref, w3_ref, b3_ref,
               o_ref, frame_ref):
        # frame_ref: persistent VMEM scratch (Hp, Wp, width) bf16 — the
        # zero-padded conv2 input frame (1 top/left pad, slack rows on the
        # bottom/right so every tap slice stays in bounds).
        for b in range(Bt):                               # small static unroll
            x = x_ref[b]                                  # (H, W, Cin) bf16

            # ---- conv1 (1x1, BN1 scale pre-folded) + bias + ReLU ----------
            h1 = jnp.dot(x.reshape(H * W, Cin), w1_ref[...],
                         preferred_element_type=jnp.float32)
            h1 = jnp.maximum(h1 + b1_ref[...], 0.0).astype(jnp.bfloat16)

            # ---- conv2 (3x3, pad=1, stride=1) -----------------------------
            # Zero the frame, then store h1 into the interior.  Full-frame
            # zero every image: cheap vs. the matmuls and independent of how
            # the batch grid axis is sharded across TensorCores.
            frame_ref[...] = jnp.zeros_like(frame_ref)
            frame_ref[pl.ds(1, H), pl.ds(1, W), :] = h1.reshape(H, W, width)
            # Layout-preserving flatten (Wp % 8 == 0 keeps sublanes aligned).
            flat = frame_ref[...].reshape(F, width)

            # Output pixel (h, w) lives at flat row h*Wp + w; tap (ky, kx)
            # reads flat row h*Wp + w + ky*Wp + kx.  Pre-shift the 3 kx taps
            # once (2 misaligned copies) so every ky slice below is aligned.
            shifted = [flat[kx:kx + Ls] for kx in range(3)]   # (Ls, width)

            if use_cat3:
                # Narrow width: concat kx taps along K once -> 3 deep-K dots.
                cat3 = jnp.concatenate(shifted, axis=-1)      # (Ls, 3*width)
                acc = jnp.dot(cat3[0:L], w2_ref[0],
                              preferred_element_type=jnp.float32)
                acc = acc + jnp.dot(cat3[Wp:Wp + L], w2_ref[1],
                                    preferred_element_type=jnp.float32)
                acc = acc + jnp.dot(cat3[2 * Wp:2 * Wp + L], w2_ref[2],
                                    preferred_element_type=jnp.float32)
            else:
                # Wide width: per-tap K already fills the MXU contraction
                # depth; 9 accumulating dots, no concat relayout / extra VMEM.
                acc = None
                for kx in range(3):
                    src = shifted[kx]
                    for ky in range(3):
                        t = jnp.dot(src[ky * Wp:ky * Wp + L], w2_ref[ky, kx],
                                    preferred_element_type=jnp.float32)
                        acc = t if acc is None else acc + t

            h2 = jnp.maximum(acc + b2_ref[...], 0.0).astype(jnp.bfloat16)
            # Junk columns (w in [W, Wp)) hold relu(b2) values, never real
            # pixels — drop them BEFORE conv3 so the widest matmul only runs
            # over real data.
            h2 = h2.reshape(H, Wp, width)[:, :W, :].reshape(H * W, width)

            # ---- conv3 (1x1) + bias, bf16 residual add + ReLU -------------
            h3 = jnp.dot(h2, w3_ref[...], preferred_element_type=jnp.float32)
            h3 = (h3 + b3_ref[...]).astype(jnp.bfloat16).reshape(H, W, Cout)
            o_ref[b] = jnp.maximum(h3 + x, 0.0).astype(o_ref.dtype)

    return kernel


def bottleneck_forward(x_nhwc, w1, w2, w3, bn1, bn2, bn3, *, eps=1e-5,
                       images_per_step=1, conv2_mode="auto"):
    """x_nhwc: (N,H,W,Cin) f32; w1: (Cin,width); w2: (3,3,width,width) HWIO;
    w3: (width,Cout); bn* = (gamma, beta, mean, var).  Returns bf16 NHWC."""
    N, H, W, Cin = x_nhwc.shape
    width = w1.shape[1]
    Cout = w3.shape[1]
    assert Cin == Cout, "identity residual requires Cin == Cout (downsample=None)"
    Bt = int(images_per_step)
    assert N % Bt == 0, "batch must be divisible by images_per_step"
    Wp = _round_up(W + 2, 8)     # padded width, sublane-aligned
    Hp = H + 3                   # 1 top pad row + bottom pad/slack rows

    if conv2_mode == "auto":
        use_cat3 = width < 128   # wide layers: per-tap K already fills the MXU
    else:
        use_cat3 = (conv2_mode == "cat3")

    def fold(gamma, beta, mean, var):
        s = gamma / jnp.sqrt(var + eps)
        return s, beta - mean * s

    s1, b1 = fold(*bn1)
    s2, b2 = fold(*bn2)
    s3, b3 = fold(*bn3)

    # Fold BN scales into the conv weights (host side); bf16 MXU operands.
    w1f = (w1 * s1[None, :]).astype(jnp.bfloat16)                  # (Cin, width)
    w2f = (w2 * s2[None, None, None, :]).astype(jnp.bfloat16)      # (3,3,w,w) HWIO
    w2p = w2f.reshape(3, 3 * width, width) if use_cat3 else w2f
    w3f = (w3 * s3[None, :]).astype(jnp.bfloat16)                  # (width, Cout)
    b1 = b1.reshape(1, width).astype(jnp.float32)
    b2 = b2.reshape(1, width).astype(jnp.float32)
    b3 = b3.reshape(1, Cout).astype(jnp.float32)
    xb = x_nhwc.astype(jnp.bfloat16)

    kernel = _make_kernel(Bt, H, W, Cin, width, Cout, Hp, Wp, use_cat3)

    full = lambda shape: pl.BlockSpec(shape, lambda n: (0,) * len(shape))

    # Advisory cost estimate (conv2 really runs H*Wp rows; output is bf16).
    flops = 2 * N * (H * W * Cin * width
                     + H * Wp * 9 * width * width
                     + H * W * width * Cout)
    bytes_accessed = (xb.size * 2 + N * H * W * Cout * 2
                      + (w1f.size + w2p.size + w3f.size) * 2
                      + (b1.size + b2.size + b3.size) * 4)

    # Explicit VMEM budget: double-buffered x/out blocks + resident weights
    # + padded frame scratch + in-kernel temporaries, with 2x headroom.
    L = H * Wp
    est = (2 * (Bt * H * W * Cin + Bt * H * W * Cout) * 2          # x/out blocks
           + 2 * ((Cin * width + 9 * width * width + width * Cout) * 2
                  + (2 * width + Cout) * 4)                        # weights+biases
           + Hp * Wp * width * 2                                   # frame scratch
           + H * W * width * 4 + L * width * 4 + L * width * 2     # h1/acc/h2
           + H * W * Cout * 4                                      # h3
           + (3 if use_cat3 else 2) * (L + 2 * Wp) * width * 2)    # shifted/cat3
    vmem_limit = int(min(max(2 * est, 16 << 20), 64 << 20))

    return pl.pallas_call(
        kernel,
        out_shape=jax.ShapeDtypeStruct((N, H, W, Cout), jnp.bfloat16),
        grid_spec=pltpu.PrefetchScalarGridSpec(
            num_scalar_prefetch=0,
            grid=(N // Bt,),
            in_specs=[
                pl.BlockSpec((Bt, H, W, Cin), lambda n: (n, 0, 0, 0)),  # x
                full(tuple(w1f.shape)),                                 # w1 (scaled)
                full(tuple(b1.shape)),                                  # bn1 bias
                full(tuple(w2p.shape)),                                 # w2 (scaled)
                full(tuple(b2.shape)),                                  # bn2 bias
                full(tuple(w3f.shape)),                                 # w3 (scaled)
                full(tuple(b3.shape)),                                  # bn3 bias
            ],
            out_specs=pl.BlockSpec((Bt, H, W, Cout), lambda n: (n, 0, 0, 0)),
            scratch_shapes=[pltpu.VMEM((Hp, Wp, width), jnp.bfloat16)],
        ),
        compiler_params=pltpu.CompilerParams(
            dimension_semantics=("parallel",),
            vmem_limit_bytes=vmem_limit),
        cost_estimate=pl.CostEstimate(
            flops=flops, transcendentals=0, bytes_accessed=bytes_accessed),
    )(xb, w1f, b1, w2p, b2, w3f, b3)


def _ref_forward(x, w1, w2, w3, bn1, bn2, bn3, eps=1e-5):
    # Pure-JAX f32 reference (NHWC) matching the PyTorch module semantics.
    def bn(y, p):
        g, b, m, v = p
        return g * (y - m) / jnp.sqrt(v + eps) + b
    h = jnp.einsum('nhwc,cd->nhwd', x, w1)
    h = jax.nn.relu(bn(h, bn1))
    h = jax.lax.conv_general_dilated(
        h, w2, window_strides=(1, 1), padding='SAME',
        dimension_numbers=('NHWC', 'HWIO', 'NHWC'))
    h = jax.nn.relu(bn(h, bn2))
    h = jnp.einsum('nhwc,cd->nhwd', h, w3)
    h = bn(h, bn3)
    return jax.nn.relu(h + x)


if __name__ == "__main__":
    def bn_params(k, c):
        k1, k2, k3, k4 = jax.random.split(k, 4)
        gamma = jax.random.uniform(k1, (c,), jnp.float32, 0.5, 1.5)
        beta = jax.random.normal(k2, (c,), jnp.float32) * 0.1
        mean = jax.random.normal(k3, (c,), jnp.float32) * 0.1
        var = jax.random.uniform(k4, (c,), jnp.float32, 0.5, 1.5)
        return gamma, beta, mean, var

    def run_case(key, N, H, W, planes, images_per_step, conv2_mode, tol):
        # Module config: inplanes = planes * expansion so the identity add
        # works with downsample=None (reference module defaults, stride=1).
        expansion = 4
        inplanes = planes * expansion
        width = planes                    # base_width=64, groups=1 -> width=planes
        cout = planes * expansion
        keys = jax.random.split(key, 7)

        x = jax.random.normal(keys[0], (N, H, W, inplanes), jnp.float32)
        w1 = jax.random.normal(keys[1], (inplanes, width), jnp.float32) * (inplanes ** -0.5)
        w2 = jax.random.normal(keys[2], (3, 3, width, width), jnp.float32) * ((9 * width) ** -0.5)
        w3 = jax.random.normal(keys[3], (width, cout), jnp.float32) * (width ** -0.5)
        bn1 = bn_params(keys[4], width)
        bn2 = bn_params(keys[5], width)
        bn3 = bn_params(keys[6], cout)

        out = bottleneck_forward(x, w1, w2, w3, bn1, bn2, bn3,
                                 images_per_step=images_per_step,
                                 conv2_mode=conv2_mode)
        out = jax.block_until_ready(out)
        assert out.shape == (N, H, W, cout)
        assert out.dtype == jnp.bfloat16

        ref = _ref_forward(x, w1, w2, w3, bn1, bn2, bn3)
        out32 = out.astype(jnp.float32)
        err = jnp.max(jnp.abs(out32 - ref))
        # bf16 MXU/residual path vs f32 reference -> loosened tolerance.
        assert jnp.allclose(out32, ref, atol=tol, rtol=tol), f"max abs err {err}"

    root = jax.random.PRNGKey(0)
    kA, kB = jax.random.split(root, 2)

    # Case A: narrow width (cat3 deep-K path), W % 8 == 0, 2 images per step.
    run_case(kA, N=2, H=8, W=8, planes=4, images_per_step=2,
             conv2_mode="auto", tol=5e-2)
    # Case B: 7x7 stage shape (W % 8 != 0), direct 9-dot path forced for
    # coverage of the wide-width conv2 branch and the padded-column dropping.
    run_case(kB, N=2, H=7, W=7, planes=8, images_per_step=1,
             conv2_mode="direct", tol=5e-2)

    print("KERNEL_OK")
</pallas_src>

<mosaic_0001>
module attributes {stable_mosaic.version = 11 : i64} {
  func.func @kernel(%arg0: i32, %arg1: memref<2x8x8x16xbf16, #tpu.memory_space<vmem>>, %arg2: memref<16x4xbf16, #tpu.memory_space<vmem>>, %arg3: memref<1x4xf32, #tpu.memory_space<vmem>>, %arg4: memref<3x12x4xbf16, #tpu.memory_space<vmem>>, %arg5: memref<1x4xf32, #tpu.memory_space<vmem>>, %arg6: memref<4x16xbf16, #tpu.memory_space<vmem>>, %arg7: memref<1x16xf32, #tpu.memory_space<vmem>>, %arg8: memref<2x8x8x16xbf16, #tpu.memory_space<vmem>>, %arg9: memref<11x16x4xbf16, #tpu.memory_space<vmem>>) attributes {dimension_semantics = [#tpu.dimension_semantics<parallel>], iteration_bounds = array<i64: 1>, scalar_prefetch = 0 : i64, scratch_operands = 1 : i64, tpu.core_type = #tpu.core_type<tc>, window_params = [{transform_indices = @transform_0, window_bounds = array<i64: 2, 8, 8, 16>}, {pipeline_mode = #tpu.pipeline_mode<synchronous>, transform_indices = @transform_1, window_bounds = array<i64: 16, 4>}, {pipeline_mode = #tpu.pipeline_mode<synchronous>, transform_indices = @transform_2, window_bounds = array<i64: 1, 4>}, {pipeline_mode = #tpu.pipeline_mode<synchronous>, transform_indices = @transform_3, window_bounds = array<i64: 3, 12, 4>}, {pipeline_mode = #tpu.pipeline_mode<synchronous>, transform_indices = @transform_4, window_bounds = array<i64: 1, 4>}, {pipeline_mode = #tpu.pipeline_mode<synchronous>, transform_indices = @transform_5, window_bounds = array<i64: 4, 16>}, {pipeline_mode = #tpu.pipeline_mode<synchronous>, transform_indices = @transform_6, window_bounds = array<i64: 1, 16>}, {transform_indices = @transform_7, window_bounds = array<i64: 2, 8, 8, 16>}]} {
    %c0 = arith.constant 0 : index
    %c0_0 = arith.constant 0 : index
    %c0_1 = arith.constant 0 : index
    %c0_2 = arith.constant 0 : index
    %0 = vector.load %arg1[%c0, %c0_0, %c0_1, %c0_2] : memref<2x8x8x16xbf16, #tpu.memory_space<vmem>>, vector<1x8x8x16xbf16>
    %1 = vector.shape_cast %0 : vector<1x8x8x16xbf16> to vector<8x8x16xbf16>
    %2 = vector.shape_cast %1 : vector<8x8x16xbf16> to vector<64x16xbf16>
    %c0_3 = arith.constant 0 : index
    %c0_4 = arith.constant 0 : index
    %3 = vector.load %arg2[%c0_3, %c0_4] : memref<16x4xbf16, #tpu.memory_space<vmem>>, vector<16x4xbf16>
    %cst = arith.constant dense<0.000000e+00> : vector<64x4xf32>
    %4 = tpu.matmul %2, %3, %cst {dimension_numbers = #tpu.dot_dimension_numbers<[1], [0], [0], [1], [0, 0, 1, 1], [], []>} : vector<64x16xbf16>, vector<16x4xbf16>, vector<64x4xf32> -> vector<64x4xf32>
    %c0_5 = arith.constant 0 : index
    %c0_6 = arith.constant 0 : index
    %5 = vector.load %arg3[%c0_5, %c0_6] : memref<1x4xf32, #tpu.memory_space<vmem>>, vector<1x4xf32>
    %6 = vector.broadcast %5 : vector<1x4xf32> to vector<64x4xf32>
    %7 = arith.addf %4, %6 : vector<64x4xf32>
    %cst_7 = arith.constant 0.000000e+00 : f32
    %8 = vector.broadcast %cst_7 : f32 to vector<64x4xf32>
    %9 = arith.maximumf %7, %8 : vector<64x4xf32>
    %10 = arith.truncf %9 : vector<64x4xf32> to vector<64x4xbf16>
    %cst_8 = arith.constant 0.000000e+00 : bf16
    %11 = vector.broadcast %cst_8 : bf16 to vector<11x16x4xbf16>
    %c0_9 = arith.constant 0 : index
    %c0_10 = arith.constant 0 : index
    %c0_11 = arith.constant 0 : index
    %12 = vector.load %arg9[%c0_9, %c0_10, %c0_11] : memref<11x16x4xbf16, #tpu.memory_space<vmem>>, vector<11x16x4xbf16>
    tpu.vector_store %arg9[%c0_9, %c0_10, %c0_11], %11 {strides = array<i32>} : memref<11x16x4xbf16, #tpu.memory_space<vmem>>, vector<11x16x4xbf16>,
    %13 = vector.shape_cast %10 : vector<64x4xbf16> to vector<8x8x4xbf16>
    %c1 = arith.constant 1 : index
    %c1_12 = arith.constant 1 : index
    %c0_13 = arith.constant 0 : index
    %14 = vector.load %arg9[%c1, %c1_12, %c0_13] : memref<11x16x4xbf16, #tpu.memory_space<vmem>>, vector<8x8x4xbf16>
    tpu.vector_store %arg9[%c1, %c1_12, %c0_13], %13 {strides = array<i32>} : memref<11x16x4xbf16, #tpu.memory_space<vmem>>, vector<8x8x4xbf16>,
    %c0_14 = arith.constant 0 : index
    %c0_15 = arith.constant 0 : index
    %c0_16 = arith.constant 0 : index
    %15 = vector.load %arg9[%c0_14, %c0_15, %c0_16] : memref<11x16x4xbf16, #tpu.memory_space<vmem>>, vector<11x16x4xbf16>
    %16 = vector.shape_cast %15 : vector<11x16x4xbf16> to vector<176x4xbf16>
    %17 = vector.extract_strided_slice %16 {offsets = [0, 0], sizes = [160, 4], strides = [1, 1]} : vector<176x4xbf16> to vector<160x4xbf16>
    %18 = vector.extract_strided_slice %16 {offsets = [1, 0], sizes = [160, 4], strides = [1, 1]} : vector<176x4xbf16> to vector<160x4xbf16>
    %19 = vector.extract_strided_slice %16 {offsets = [2, 0], sizes = [160, 4], strides = [1, 1]} : vector<176x4xbf16> to vector<160x4xbf16>
    %20 = tpu.concatenate %17, %18, %19 in 1 : vector<160x4xbf16>, vector<160x4xbf16>, vector<160x4xbf16> -> vector<160x12xbf16>
    %21 = vector.extract_strided_slice %20 {offsets = [0, 0], sizes = [128, 12], strides = [1, 1]} : vector<160x12xbf16> to vector<128x12xbf16>
    %c0_17 = arith.constant 0 : index
    %c0_18 = arith.constant 0 : index
    %c0_19 = arith.constant 0 : index
    %22 = vector.load %arg4[%c0_17, %c0_18, %c0_19] : memref<3x12x4xbf16, #tpu.memory_space<vmem>>, vector<1x12x4xbf16>
    %23 = vector.shape_cast %22 : vector<1x12x4xbf16> to vector<12x4xbf16>
    %cst_20 = arith.constant dense<0.000000e+00> : vector<128x4xf32>
    %24 = tpu.matmul %21, %23, %cst_20 {dimension_numbers = #tpu.dot_dimension_numbers<[1], [0], [0], [1], [0, 0, 1, 1], [], []>} : vector<128x12xbf16>, vector<12x4xbf16>, vector<128x4xf32> -> vector<128x4xf32>
    %25 = vector.extract_strided_slice %20 {offsets = [16, 0], sizes = [128, 12], strides = [1, 1]} : vector<160x12xbf16> to vector<128x12xbf16>
    %c1_21 = arith.constant 1 : index
    %c0_22 = arith.constant 0 : index
    %c0_23 = arith.constant 0 : index
    %26 = vector.load %arg4[%c1_21, %c0_22, %c0_23] : memref<3x12x4xbf16, #tpu.memory_space<vmem>>, vector<1x12x4xbf16>
    %27 = vector.shape_cast %26 : vector<1x12x4xbf16> to vector<12x4xbf16>
    %cst_24 = arith.constant dense<0.000000e+00> : vector<128x4xf32>
    %28 = tpu.matmul %25, %27, %cst_24 {dimension_numbers = #tpu.dot_dimension_numbers<[1], [0], [0], [1], [0, 0, 1, 1], [], []>} : vector<128x12xbf16>, vector<12x4xbf16>, vector<128x4xf32> -> vector<128x4xf32>
    %29 = arith.addf %24, %28 : vector<128x4xf32>
    %30 = vector.extract_strided_slice %20 {offsets = [32, 0], sizes = [128, 12], strides = [1, 1]} : vector<160x12xbf16> to vector<128x12xbf16>
    %c2 = arith.constant 2 : index
    %c0_25 = arith.constant 0 : index
    %c0_26 = arith.constant 0 : index
    %31 = vector.load %arg4[%c2, %c0_25, %c0_26] : memref<3x12x4xbf16, #tpu.memory_space<vmem>>, vector<1x12x4xbf16>
    %32 = vector.shape_cast %31 : vector<1x12x4xbf16> to vector<12x4xbf16>
    %cst_27 = arith.constant dense<0.000000e+00> : vector<128x4xf32>
    %33 = tpu.matmul %30, %32, %cst_27 {dimension_numbers = #tpu.dot_dimension_numbers<[1], [0], [0], [1], [0, 0, 1, 1], [], []>} : vector<128x12xbf16>, vector<12x4xbf16>, vector<128x4xf32> -> vector<128x4xf32>
    %34 = arith.addf %29, %33 : vector<128x4xf32>
    %c0_28 = arith.constant 0 : index
    %c0_29 = arith.constant 0 : index
    %35 = vector.load %arg5[%c0_28, %c0_29] : memref<1x4xf32, #tpu.memory_space<vmem>>, vector<1x4xf32>
    %36 = vector.broadcast %35 : vector<1x4xf32> to vector<128x4xf32>
    %37 = arith.addf %34, %36 : vector<128x4xf32>
    %cst_30 = arith.constant 0.000000e+00 : f32
    %38 = vector.broadcast %cst_30 : f32 to vector<128x4xf32>
    %39 = arith.maximumf %37, %38 : vector<128x4xf32>
    %40 = arith.truncf %39 : vector<128x4xf32> to vector<128x4xbf16>
    %41 = vector.shape_cast %40 : vector<128x4xbf16> to vector<8x16x4xbf16>
    %42 = vector.extract_strided_slice %41 {offsets = [0, 0, 0], sizes = [8, 8, 4], strides = [1, 1, 1]} : vector<8x16x4xbf16> to vector<8x8x4xbf16>
    %43 = vector.shape_cast %42 : vector<8x8x4xbf16> to vector<64x4xbf16>
    %c0_31 = arith.constant 0 : index
    %c0_32 = arith.constant 0 : index
    %44 = vector.load %arg6[%c0_31, %c0_32] : memref<4x16xbf16, #tpu.memory_space<vmem>>, vector<4x16xbf16>
    %cst_33 = arith.constant dense<0.000000e+00> : vector<64x16xf32>
    %45 = tpu.matmul %43, %44, %cst_33 {dimension_numbers = #tpu.dot_dimension_numbers<[1], [0], [0], [1], [0, 0, 1, 1], [], []>} : vector<64x4xbf16>, vector<4x16xbf16>, vector<64x16xf32> -> vector<64x16xf32>
    %c0_34 = arith.constant 0 : index
    %c0_35 = arith.constant 0 : index
    %46 = vector.load %arg7[%c0_34, %c0_35] : memref<1x16xf32, #tpu.memory_space<vmem>>, vector<1x16xf32>
    %47 = vector.broadcast %46 : vector<1x16xf32> to vector<64x16xf32>
    %48 = arith.addf %45, %47 : vector<64x16xf32>
    %49 = arith.truncf %48 : vector<64x16xf32> to vector<64x16xbf16>
    %50 = vector.shape_cast %49 : vector<64x16xbf16> to vector<8x8x16xbf16>
    %51 = arith.addf %50, %1 : vector<8x8x16xbf16>
    %cst_36 = arith.constant 0.000000e+00 : bf16
    %52 = vector.broadcast %cst_36 : bf16 to vector<8x8x16xbf16>
    %53 = arith.maximumf %51, %52 : vector<8x8x16xbf16>
    %c0_37 = arith.constant 0 : index
    %c0_38 = arith.constant 0 : index
    %c0_39 = arith.constant 0 : index
    %c0_40 = arith.constant 0 : index
    %54 = vector.load %arg8[%c0_37, %c0_38, %c0_39, %c0_40] : memref<2x8x8x16xbf16, #tpu.memory_space<vmem>>, vector<1x8x8x16xbf16>
    %55 = vector.shape_cast %54 : vector<1x8x8x16xbf16> to vector<8x8x16xbf16>
    %56 = vector.shape_cast %53 : vector<8x8x16xbf16> to vector<1x8x8x16xbf16>
    tpu.vector_store %arg8[%c0_37, %c0_38, %c0_39, %c0_40], %56 {strides = array<i32>} : memref<2x8x8x16xbf16, #tpu.memory_space<vmem>>, vector<1x8x8x16xbf16>,
    %c1_41 = arith.constant 1 : index
    %c0_42 = arith.constant 0 : index
    %c0_43 = arith.constant 0 : index
    %c0_44 = arith.constant 0 : index
    %57 = vector.load %arg1[%c1_41, %c0_42, %c0_43, %c0_44] : memref<2x8x8x16xbf16, #tpu.memory_space<vmem>>, vector<1x8x8x16xbf16>
    %58 = vector.shape_cast %57 : vector<1x8x8x16xbf16> to vector<8x8x16xbf16>
    %59 = vector.shape_cast %58 : vector<8x8x16xbf16> to vector<64x16xbf16>
    %c0_45 = arith.constant 0 : index
    %c0_46 = arith.constant 0 : index
    %60 = vector.load %arg2[%c0_45, %c0_46] : memref<16x4xbf16, #tpu.memory_space<vmem>>, vector<16x4xbf16>
    %cst_47 = arith.constant dense<0.000000e+00> : vector<64x4xf32>
    %61 = tpu.matmul %59, %60, %cst_47 {dimension_numbers = #tpu.dot_dimension_numbers<[1], [0], [0], [1], [0, 0, 1, 1], [], []>} : vector<64x16xbf16>, vector<16x4xbf16>, vector<64x4xf32> -> vector<64x4xf32>
    %c0_48 = arith.constant 0 : index
    %c0_49 = arith.constant 0 : index
    %62 = vector.load %arg3[%c0_48, %c0_49] : memref<1x4xf32, #tpu.memory_space<vmem>>, vector<1x4xf32>
    %63 = vector.broadcast %62 : vector<1x4xf32> to vector<64x4xf32>
    %64 = arith.addf %61, %63 : vector<64x4xf32>
    %cst_50 = arith.constant 0.000000e+00 : f32
    %65 = vector.broadcast %cst_50 : f32 to vector<64x4xf32>
    %66 = arith.maximumf %64, %65 : vector<64x4xf32>
    %67 = arith.truncf %66 : vector<64x4xf32> to vector<64x4xbf16>
    %cst_51 = arith.constant 0.000000e+00 : bf16
    %68 = vector.broadcast %cst_51 : bf16 to vector<11x16x4xbf16>
    %c0_52 = arith.constant 0 : index
    %c0_53 = arith.constant 0 : index
    %c0_54 = arith.constant 0 : index
    %69 = vector.load %arg9[%c0_52, %c0_53, %c0_54] : memref<11x16x4xbf16, #tpu.memory_space<vmem>>, vector<11x16x4xbf16>
    tpu.vector_store %arg9[%c0_52, %c0_53, %c0_54], %68 {strides = array<i32>} : memref<11x16x4xbf16, #tpu.memory_space<vmem>>, vector<11x16x4xbf16>,
    %70 = vector.shape_cast %67 : vector<64x4xbf16> to vector<8x8x4xbf16>
    %c1_55 = arith.constant 1 : index
    %c1_56 = arith.constant 1 : index
    %c0_57 = arith.constant 0 : index
    %71 = vector.load %arg9[%c1_55, %c1_56, %c0_57] : memref<11x16x4xbf16, #tpu.memory_space<vmem>>, vector<8x8x4xbf16>
    tpu.vector_store %arg9[%c1_55, %c1_56, %c0_57], %70 {strides = array<i32>} : memref<11x16x4xbf16, #tpu.memory_space<vmem>>, vector<8x8x4xbf16>,
    %c0_58 = arith.constant 0 : index
    %c0_59 = arith.constant 0 : index
    %c0_60 = arith.constant 0 : index
    %72 = vector.load %arg9[%c0_58, %c0_59, %c0_60] : memref<11x16x4xbf16, #tpu.memory_space<vmem>>, vector<11x16x4xbf16>
    %73 = vector.shape_cast %72 : vector<11x16x4xbf16> to vector<176x4xbf16>
    %74 = vector.extract_strided_slice %73 {offsets = [0, 0], sizes = [160, 4], strides = [1, 1]} : vector<176x4xbf16> to vector<160x4xbf16>
    %75 = vector.extract_strided_slice %73 {offsets = [1, 0], sizes = [160, 4], strides = [1, 1]} : vector<176x4xbf16> to vector<160x4xbf16>
    %76 = vector.extract_strided_slice %73 {offsets = [2, 0], sizes = [160, 4], strides = [1, 1]} : vector<176x4xbf16> to vector<160x4xbf16>
    %77 = tpu.concatenate %74, %75, %76 in 1 : vector<160x4xbf16>, vector<160x4xbf16>, vector<160x4xbf16> -> vector<160x12xbf16>
    %78 = vector.extract_strided_slice %77 {offsets = [0, 0], sizes = [128, 12], strides = [1, 1]} : vector<160x12xbf16> to vector<128x12xbf16>
    %c0_61 = arith.constant 0 : index
    %c0_62 = arith.constant 0 : index
    %c0_63 = arith.constant 0 : index
    %79 = vector.load %arg4[%c0_61, %c0_62, %c0_63] : memref<3x12x4xbf16, #tpu.memory_space<vmem>>, vector<1x12x4xbf16>
    %80 = vector.shape_cast %79 : vector<1x12x4xbf16> to vector<12x4xbf16>
    %cst_64 = arith.constant dense<0.000000e+00> : vector<128x4xf32>
    %81 = tpu.matmul %78, %80, %cst_64 {dimension_numbers = #tpu.dot_dimension_numbers<[1], [0], [0], [1], [0, 0, 1, 1], [], []>} : vector<128x12xbf16>, vector<12x4xbf16>, vector<128x4xf32> -> vector<128x4xf32>
    %82 = vector.extract_strided_slice %77 {offsets = [16, 0], sizes = [128, 12], strides = [1, 1]} : vector<160x12xbf16> to vector<128x12xbf16>
    %c1_65 = arith.constant 1 : index
    %c0_66 = arith.constant 0 : index
    %c0_67 = arith.constant 0 : index
    %83 = vector.load %arg4[%c1_65, %c0_66, %c0_67] : memref<3x12x4xbf16, #tpu.memory_space<vmem>>, vector<1x12x4xbf16>
    %84 = vector.shape_cast %83 : vector<1x12x4xbf16> to vector<12x4xbf16>
    %cst_68 = arith.constant dense<0.000000e+00> : vector<128x4xf32>
    %85 = tpu.matmul %82, %84, %cst_68 {dimension_numbers = #tpu.dot_dimension_numbers<[1], [0], [0], [1], [0, 0, 1, 1], [], []>} : vector<128x12xbf16>, vector<12x4xbf16>, vector<128x4xf32> -> vector<128x4xf32>
    %86 = arith.addf %81, %85 : vector<128x4xf32>
    %87 = vector.extract_strided_slice %77 {offsets = [32, 0], sizes = [128, 12], strides = [1, 1]} : vector<160x12xbf16> to vector<128x12xbf16>
    %c2_69 = arith.constant 2 : index
    %c0_70 = arith.constant 0 : index
    %c0_71 = arith.constant 0 : index
    %88 = vector.load %arg4[%c2_69, %c0_70, %c0_71] : memref<3x12x4xbf16, #tpu.memory_space<vmem>>, vector<1x12x4xbf16>
    %89 = vector.shape_cast %88 : vector<1x12x4xbf16> to vector<12x4xbf16>
    %cst_72 = arith.constant dense<0.000000e+00> : vector<128x4xf32>
    %90 = tpu.matmul %87, %89, %cst_72 {dimension_numbers = #tpu.dot_dimension_numbers<[1], [0], [0], [1], [0, 0, 1, 1], [], []>} : vector<128x12xbf16>, vector<12x4xbf16>, vector<128x4xf32> -> vector<128x4xf32>
    %91 = arith.addf %86, %90 : vector<128x4xf32>
    %c0_73 = arith.constant 0 : index
    %c0_74 = arith.constant 0 : index
    %92 = vector.load %arg5[%c0_73, %c0_74] : memref<1x4xf32, #tpu.memory_space<vmem>>, vector<1x4xf32>
    %93 = vector.broadcast %92 : vector<1x4xf32> to vector<128x4xf32>
    %94 = arith.addf %91, %93 : vector<128x4xf32>
    %cst_75 = arith.constant 0.000000e+00 : f32
    %95 = vector.broadcast %cst_75 : f32 to vector<128x4xf32>
    %96 = arith.maximumf %94, %95 : vector<128x4xf32>
    %97 = arith.truncf %96 : vector<128x4xf32> to vector<128x4xbf16>
    %98 = vector.shape_cast %97 : vector<128x4xbf16> to vector<8x16x4xbf16>
    %99 = vector.extract_strided_slice %98 {offsets = [0, 0, 0], sizes = [8, 8, 4], strides = [1, 1, 1]} : vector<8x16x4xbf16> to vector<8x8x4xbf16>
    %100 = vector.shape_cast %99 : vector<8x8x4xbf16> to vector<64x4xbf16>
    %c0_76 = arith.constant 0 : index
    %c0_77 = arith.constant 0 : index
    %101 = vector.load %arg6[%c0_76, %c0_77] : memref<4x16xbf16, #tpu.memory_space<vmem>>, vector<4x16xbf16>
    %cst_78 = arith.constant dense<0.000000e+00> : vector<64x16xf32>
    %102 = tpu.matmul %100, %101, %cst_78 {dimension_numbers = #tpu.dot_dimension_numbers<[1], [0], [0], [1], [0, 0, 1, 1], [], []>} : vector<64x4xbf16>, vector<4x16xbf16>, vector<64x16xf32> -> vector<64x16xf32>
    %c0_79 = arith.constant 0 : index
    %c0_80 = arith.constant 0 : index
    %103 = vector.load %arg7[%c0_79, %c0_80] : memref<1x16xf32, #tpu.memory_space<vmem>>, vector<1x16xf32>
    %104 = vector.broadcast %103 : vector<1x16xf32> to vector<64x16xf32>
    %105 = arith.addf %102, %104 : vector<64x16xf32>
    %106 = arith.truncf %105 : vector<64x16xf32> to vector<64x16xbf16>
    %107 = vector.shape_cast %106 : vector<64x16xbf16> to vector<8x8x16xbf16>
    %108 = arith.addf %107, %58 : vector<8x8x16xbf16>
    %cst_81 = arith.constant 0.000000e+00 : bf16
    %109 = vector.broadcast %cst_81 : bf16 to vector<8x8x16xbf16>
    %110 = arith.maximumf %108, %109 : vector<8x8x16xbf16>
    %c1_82 = arith.constant 1 : index
    %c0_83 = arith.constant 0 : index
    %c0_84 = arith.constant 0 : index
    %c0_85 = arith.constant 0 : index
    %111 = vector.load %arg8[%c1_82, %c0_83, %c0_84, %c0_85] : memref<2x8x8x16xbf16, #tpu.memory_space<vmem>>, vector<1x8x8x16xbf16>
    %112 = vector.shape_cast %111 : vector<1x8x8x16xbf16> to vector<8x8x16xbf16>
    %113 = vector.shape_cast %110 : vector<8x8x16xbf16> to vector<1x8x8x16xbf16>
    tpu.vector_store %arg8[%c1_82, %c0_83, %c0_84, %c0_85], %113 {strides = array<i32>} : memref<2x8x8x16xbf16, #tpu.memory_space<vmem>>, vector<1x8x8x16xbf16>,
    return
  }
  func.func @transform_0(%arg0: i32) -> (i32, i32, i32, i32) {
    %c0_i32 = arith.constant 0 : i32
    %c0_i32_0 = arith.constant 0 : i32
    %c0_i32_1 = arith.constant 0 : i32
    %c0_i32_2 = arith.constant 0 : i32
    return %arg0, %c0_i32, %c0_i32_0, %c0_i32_1 : i32, i32, i32, i32
  }
  func.func @transform_1(%arg0: i32) -> (i32, i32) {
    %c0_i32 = arith.constant 0 : i32
    %c0_i32_0 = arith.constant 0 : i32
    %c0_i32_1 = arith.constant 0 : i32
    return %c0_i32, %c0_i32_0 : i32, i32
  }
  func.func @transform_2(%arg0: i32) -> (i32, i32) {
    %c0_i32 = arith.constant 0 : i32
    %c0_i32_0 = arith.constant 0 : i32
    %c0_i32_1 = arith.constant 0 : i32
    return %c0_i32, %c0_i32_0 : i32, i32
  }
  func.func @transform_3(%arg0: i32) -> (i32, i32, i32) {
    %c0_i32 = arith.constant 0 : i32
    %c0_i32_0 = arith.constant 0 : i32
    %c0_i32_1 = arith.constant 0 : i32
    %c0_i32_2 = arith.constant 0 : i32
    return %c0_i32, %c0_i32_0, %c0_i32_1 : i32, i32, i32
  }
  func.func @transform_4(%arg0: i32) -> (i32, i32) {
    %c0_i32 = arith.constant 0 : i32
    %c0_i32_0 = arith.constant 0 : i32
    %c0_i32_1 = arith.constant 0 : i32
    return %c0_i32, %c0_i32_0 : i32, i32
  }
  func.func @transform_5(%arg0: i32) -> (i32, i32) {
    %c0_i32 = arith.constant 0 : i32
    %c0_i32_0 = arith.constant 0 : i32
    %c0_i32_1 = arith.constant 0 : i32
    return %c0_i32, %c0_i32_0 : i32, i32
  }
  func.func @transform_6(%arg0: i32) -> (i32, i32) {
    %c0_i32 = arith.constant 0 : i32
    %c0_i32_0 = arith.constant 0 : i32
    %c0_i32_1 = arith.constant 0 : i32
    return %c0_i32, %c0_i32_0 : i32, i32
  }
  func.func @transform_7(%arg0: i32) -> (i32, i32, i32, i32) {
    %c0_i32 = arith.constant 0 : i32
    %c0_i32_0 = arith.constant 0 : i32
    %c0_i32_1 = arith.constant 0 : i32
    %c0_i32_2 = arith.constant 0 : i32
    return %arg0, %c0_i32, %c0_i32_0, %c0_i32_1 : i32, i32, i32, i32
  }
}

</mosaic_0001>

<llo_original>
// kernel: tpu_custom_call.1
$region0: #{tpu_custom_call.1}
  #allocation0 [shape = 'u32[]', space=smem, size = 0x4, offset = 0x4, fixed_abs, tag = 'smem constant byte address 0x4 - core index']
  #allocation1 [shape = 'u32[144,128]{1,0:T(1,128)}', space=vmem, size = 0x12000, scoped, tag = 'internal scratch']
  #allocation2 [shape = 'bf16[11,16,4]{2,1,0:T(16,128)(2,1)}', space=vmem, size = 0xb000, scoped, tag = 'scratch operand']
  %s0 = inlined_call_operand.hbm [shape: bf16[2,8,8,16], index: 0, kind: input, shape index: {}]
  %s1 = inlined_call_operand.vmem [shape: bf16[16,4], index: 1, kind: input, shape index: {}]
  %s2 = inlined_call_operand.vmem [shape: f32[1,4], index: 2, kind: input, shape index: {}]
  %s3 = inlined_call_operand.vmem [shape: bf16[3,12,4], index: 3, kind: input, shape index: {}]
  %s4 = inlined_call_operand.vmem [shape: f32[1,4], index: 4, kind: input, shape index: {}]
  %s5 = inlined_call_operand.vmem [shape: bf16[4,16], index: 5, kind: input, shape index: {}]
  %s6 = inlined_call_operand.vmem [shape: f32[1,16], index: 6, kind: input, shape index: {}]
  %s7 = inlined_call_operand.hbm [shape: bf16[2,8,8,16], index: 7, kind: output, shape index: {}]
  %s8 = sld [smem:[#allocation0]]
  $region42: #{tpu_custom_call.1} parent=0
    _
  %s10 = ssub.s32 1, %s8
  %s11 = scalar_select 0, %s10, %s8
  $region1: #{tpu_custom_call.1} parent=0
    #allocation3 [shape = 'u8[32768]{0}', space=vmem, size = 0x8000, scoped, tag = 'input window, operand 0, single buffered']
    #allocation4 [shape = 's32[1]{0}', space=sflag, size = 0x4, scoped, tag = 'scoped memory for tpu_custom_call.1']
    #allocation5 [shape = 's32[1]{0}', space=sflag, size = 0x4, scoped, tag = 'scoped memory for tpu_custom_call.1']
    #allocation6 [shape = 'u8[32768]{0}', space=vmem, size = 0x8000, scoped, tag = 'output window, operand 0, single buffered']
    %12 = vsyncpa [#allocation4], 0
    %13 = vsyncpa [#allocation5], 0
    // Predicated region
    $region2: #{tpu_custom_call.1} parent=1 // pred_check
      _
    $region3: #{tpu_custom_call.1} parent=1 // pred_check_branch
      %15 = sbr.rel (0) target = $region5
    $region4: #{tpu_custom_call.1} parent=1 // pred_region
      %s17 = ssub.s32 1024, 1024
      %18 = vsyncadd [#allocation4], %s17
      %s19 = sshll.u32 [#allocation3], 4
      %s20 = int_to_ptr.vmem [resolvable:$true] %s19
      %25 = dma.hbm_to_vmem [thread:$0]  %s0, 1024, %s20, [#allocation4], 64, 64, 4
    $region5: #{tpu_custom_call.1} parent=1 // pred_fallthru
      _
    // Predicated region
    $region6: #{tpu_custom_call.1} parent=1 // pred_check
      _
    $region7: #{tpu_custom_call.1} parent=1 // pred_check_branch
      %27 = sbr.rel (0) target = $region9
    $region8: #{tpu_custom_call.1} parent=1 // pred_region
      _
    $region9: #{tpu_custom_call.1} parent=1 // pred_fallthru
      _
    // Predicated region
    $region10: #{tpu_custom_call.1} parent=1 // pred_check
      _
    $region11: #{tpu_custom_call.1} parent=1 // pred_check_branch
      %29 = sbr.rel (0) target = $region13
    $region12: #{tpu_custom_call.1} parent=1 // pred_region
      _
    $region13: #{tpu_custom_call.1} parent=1 // pred_fallthru
      _
    // Predicated region
    $region14: #{tpu_custom_call.1} parent=1 // pred_check
      _
    $region15: #{tpu_custom_call.1} parent=1 // pred_check_branch
      %31 = sbr.rel (0) target = $region17
    $region16: #{tpu_custom_call.1} parent=1 // pred_region
      _
    $region17: #{tpu_custom_call.1} parent=1 // pred_fallthru
      _
    // Predicated region
    $region18: #{tpu_custom_call.1} parent=1 // pred_check
      _
    $region19: #{tpu_custom_call.1} parent=1 // pred_check_branch
      %33 = sbr.rel (0) target = $region21
    $region20: #{tpu_custom_call.1} parent=1 // pred_region
      _
    $region21: #{tpu_custom_call.1} parent=1 // pred_fallthru
      _
    // Predicated region
    $region22: #{tpu_custom_call.1} parent=1 // pred_check
      _
    $region23: #{tpu_custom_call.1} parent=1 // pred_check_branch
      %35 = sbr.rel (0) target = $region25
    $region24: #{tpu_custom_call.1} parent=1 // pred_region
      _
    $region25: #{tpu_custom_call.1} parent=1 // pred_fallthru
      _
    // Predicated region
    $region26: #{tpu_custom_call.1} parent=1 // pred_check
      _
    $region27: #{tpu_custom_call.1} parent=1 // pred_check_branch
      %37 = sbr.rel (0) target = $region29
    $region28: #{tpu_custom_call.1} parent=1 // pred_region
      _
    $region29: #{tpu_custom_call.1} parent=1 // pred_fallthru
      _
    // Predicated region
    $region30: #{tpu_custom_call.1} parent=1 // pred_check
      _
    $region31: #{tpu_custom_call.1} parent=1 // pred_check_branch
      %39 = sbr.rel (0) target = $region33
    $region32: #{tpu_custom_call.1} parent=1 // pred_region
      %40 = dma.done [#allocation4], 1024
    $region33: #{tpu_custom_call.1} parent=1 // pred_fallthru
      _
    %v42 = vld [vmem:[#allocation3] sm:$0xf]
    %v43 = vld [vmem:[#allocation3 + $0x4] sm:$0xf]
    %v44 = vld [vmem:[#allocation3 + $0x8] sm:$0xf]
    %v45 = vld [vmem:[#allocation3 + $0xc] sm:$0xf]
    %v46 = vld [vmem:[#allocation3 + $0x10] sm:$0xf]
    %v47 = vld [vmem:[#allocation3 + $0x14] sm:$0xf]
    %v48 = vld [vmem:[#allocation3 + $0x18] sm:$0xf]
    %v49 = vld [vmem:[#allocation3 + $0x1c] sm:$0xf]
    %v50 = vld [vmem:[%s1] sm:$0xf]
    %v51 = vld [vmem:[%s1 + $0x4] sm:$0xf]
    %v52 = vld [vmem:[%s2] sm:$0x1]
    %v54 = vlaneseq
    %v55 = vshrl.u32 %v54, 7
    %v56 = vsub.s32 0, %v55
    %v57 = vrot.slane %v52, %v56
    %v67 = vunpack.c.l.b16 %v42
    %v68 = vunpack.c.l.b16 %v43
    %v69 = vunpack.c.l.b16 %v44
    %v70 = vunpack.c.l.b16 %v45
    %v71 = vunpack.c.l.b16 %v46
    %v72 = vunpack.c.l.b16 %v47
    %v73 = vunpack.c.l.b16 %v48
    %v74 = vunpack.c.l.b16 %v49
    %v75 = vpack.c.b16 %v68, %v67
    %v76 = vpack.c.b16 %v70, %v69
    %v77 = vpack.c.b16 %v72, %v71
    %v78 = vpack.c.b16 %v74, %v73
    %v81 = vunpack.c.l.b16 %v50
    %v82 = vunpack.c.l.b16 %v51
    %v83 = vpack.c.b16 %v82, %v81
    %vm85 = vcmask 130048
    %v87 = vsel %vm85, %v75, 0
    %v90 = vsel %vm85, %v76, 0
    %v93 = vsel %vm85, %v77, 0
    %v96 = vsel %vm85, %v78, 0
    %98 = vmatprep.subr.bf16.mxu0 0
    %99 = vmatpush1.bf16.msra.mxu0 %v83
    %100 = vmatprep.subr.bf16.mxu0 0
    %101 = vmatpush1.bf16.msra.mxu0 0
    %102 = vmatprep.subr.bf16.mxu0 0
    %103 = vmatpush1.bf16.msra.mxu0 0
    %104 = vmatprep.subr.bf16.mxu0 0
    %105 = vmatpush1.bf16.msra.mxu0 0
    %106 = vmatprep.subr.bf16.mxu0 0
    %107 = vmatpush1.bf16.msra.mxu0 0
    %108 = vmatprep.subr.bf16.mxu0 0
    %109 = vmatpush1.bf16.msra.mxu0 0
    %110 = vmatprep.subr.bf16.mxu0 0
    %111 = vmatpush1.bf16.msra.mxu0 0
    %112 = vmatprep.subr.bf16.mxu0 0
    %113 = vmatpush1.bf16.msra.mxu0 0
    %114 = vmatprep.subr.bf16.mxu0 0
    %115 = vmatpush1.bf16.msra.mxu0 0
    %116 = vmatprep.subr.bf16.mxu0 0
    %117 = vmatpush1.bf16.msra.mxu0 0
    %118 = vmatprep.subr.bf16.mxu0 0
    %119 = vmatpush1.bf16.msra.mxu0 0
    %120 = vmatprep.subr.bf16.mxu0 0
    %121 = vmatpush1.bf16.msra.mxu0 0
    %122 = vmatprep.subr.bf16.mxu0 0
    %123 = vmatpush1.bf16.msra.mxu0 0
    %124 = vmatprep.subr.bf16.mxu0 0
    %125 = vmatpush1.bf16.msra.mxu0 0
    %126 = vmatprep.subr.bf16.mxu0 0
    %127 = vmatpush1.bf16.msra.mxu0 0
    %128 = vmatprep.subr.bf16.mxu0 0
    %129 = vmatpush1.bf16.msra.mxu0 0
    %130 = vmatprep.mubr.bf16.mxu0 0
    %131 = vmatmul.mubr.bf16.gmra.mrb[0].mxu0 %v87
    %v132 = vpop.f32.mrb[0].mxu0
    %v133 = vadd.f32 %v57, %v132
    %v134 = vpop.f32.mrb[0].mxu0
    %v135 = vpop.f32.mrb[0].mxu0
    %v136 = vadd.f32 %v57, %v135
    %v137 = vpop.f32.mrb[0].mxu0
    %138 = vmatprep.mubr.bf16.mxu0 0
    %139 = vmatmul.mubr.bf16.gmra.mrb[0].mxu0 %v90
    %v140 = vpop.f32.mrb[0].mxu0
    %v141 = vadd.f32 %v57, %v140
    %v142 = vpop.f32.mrb[0].mxu0
    %v143 = vpop.f32.mrb[0].mxu0
    %v144 = vadd.f32 %v57, %v143
    %v145 = vpop.f32.mrb[0].mxu0
    %146 = vmatprep.mubr.bf16.mxu0 0
    %147 = vmatmul.mubr.bf16.gmra.mrb[0].mxu0 %v93
    %v148 = vpop.f32.mrb[0].mxu0
    %v149 = vadd.f32 %v57, %v148
    %v150 = vpop.f32.mrb[0].mxu0
    %v151 = vpop.f32.mrb[0].mxu0
    %v152 = vadd.f32 %v57, %v151
    %v153 = vpop.f32.mrb[0].mxu0
    %154 = vmatprep.mubr.bf16.mxu0 0
    %155 = vmatmul.mubr.bf16.gmra.mrb[0].mxu0 %v96
    %v156 = vpop.f32.mrb[0].mxu0
    %v157 = vadd.f32 %v57, %v156
    %v158 = vpop.f32.mrb[0].mxu0
    %v159 = vpop.f32.mrb[0].mxu0
    %v160 = vadd.f32 %v57, %v159
    %v161 = vpop.f32.mrb[0].mxu0
    %162 = vdwg.mxu0
    %v163 = vmax.f32 %v133, 0.0
    %v164 = vmax.f32 %v136, 0.0
    %v165 = vmax.f32 %v141, 0.0
    %v166 = vmax.f32 %v144, 0.0
    %v167 = vmax.f32 %v149, 0.0
    %v168 = vmax.f32 %v152, 0.0
    %v169 = vmax.f32 %v157, 0.0
    %v170 = vmax.f32 %v160, 0.0
    %v171 = vpack.c.bf16 %v164, %v163
    %v172 = vpack.c.bf16 %v166, %v165
    %v173 = vpack.c.bf16 %v168, %v167
    %v174 = vpack.c.bf16 %v170, %v169
    %vm175 = vcmask 31744
    %176 = vst.msk [vmem:[#allocation2] sm:$0xff] %vm175, 0
    %177 = vst.msk [vmem:[#allocation2 + $0x8] sm:$0xff] %vm175, 0
    %178 = vst.msk [vmem:[#allocation2 + $0x10] sm:$0xff] %vm175, 0
    %179 = vst.msk [vmem:[#allocation2 + $0x18] sm:$0xff] %vm175, 0
    %180 = vst.msk [vmem:[#allocation2 + $0x20] sm:$0xff] %vm175, 0
    %181 = vst.msk [vmem:[#allocation2 + $0x28] sm:$0xff] %vm175, 0
    %182 = vst.msk [vmem:[#allocation2 + $0x30] sm:$0xff] %vm175, 0
    %183 = vst.msk [vmem:[#allocation2 + $0x38] sm:$0xff] %vm175, 0
    %184 = vst.msk [vmem:[#allocation2 + $0x40] sm:$0xff] %vm175, 0
    %185 = vst.msk [vmem:[#allocation2 + $0x48] sm:$0xff] %vm175, 0
    %186 = vst.msk [vmem:[#allocation2 + $0x50] sm:$0xff] %vm175, 0
    %v191 = vunpack.c.l.b16 %v171
    %v192 = vunpack.c.h.b16 %v171
    %v193 = vunpack.c.l.b16 %v172
    %v194 = vunpack.c.h.b16 %v172
    %v195 = vunpack.c.l.b16 %v173
    %v196 = vunpack.c.h.b16 %v173
    %v197 = vunpack.c.l.b16 %v174
    %v198 = vunpack.c.h.b16 %v174
    %v199 = vpack.c.b16 %v191, %v191
    %v200 = vpack.c.b16 %v192, %v192
    %v201 = vpack.c.b16 %v193, %v193
    %v202 = vpack.c.b16 %v194, %v194
    %v203 = vpack.c.b16 %v195, %v195
    %v204 = vpack.c.b16 %v196, %v196
    %v205 = vpack.c.b16 %v197, %v197
    %v206 = vpack.c.b16 %v198, %v198
    %v208 = vshrl.u32 %v199, 16
    %v210 = vrot.slane %v208, 7
    %v211 = vshll.u32 %v199, 16
    %v213 = vor.u32 %v210, %v211
    %v215 = vshrl.u32 %v200, 16
    %v217 = vrot.slane %v215, 7
    %v218 = vshll.u32 %v200, 16
    %v220 = vor.u32 %v217, %v218
    %v222 = vshrl.u32 %v201, 16
    %v224 = vrot.slane %v222, 7
    %v225 = vshll.u32 %v201, 16
    %v227 = vor.u32 %v224, %v225
    %v229 = vshrl.u32 %v202, 16
    %v231 = vrot.slane %v229, 7
    %v232 = vshll.u32 %v202, 16
    %v234 = vor.u32 %v231, %v232
    %v236 = vshrl.u32 %v203, 16
    %v238 = vrot.slane %v236, 7
    %v239 = vshll.u32 %v203, 16
    %v241 = vor.u32 %v238, %v239
    %v243 = vshrl.u32 %v204, 16
    %v245 = vrot.slane %v243, 7
    %v246 = vshll.u32 %v204, 16
    %v248 = vor.u32 %v245, %v246
    %v250 = vshrl.u32 %v205, 16
    %v252 = vrot.slane %v250, 7
    %v253 = vshll.u32 %v205, 16
    %v255 = vor.u32 %v252, %v253
    %v257 = vshrl.u32 %v206, 16
    %v259 = vrot.slane %v257, 7
    %v260 = vshll.u32 %v206, 16
    %v262 = vor.u32 %v259, %v260
    %s271 = scalar_lea.vmem [#allocation2], 8
    %vm272 = vcmask 28672
    %vm273 = vsmask.f32 4354
    %vm274 = vmand %vm272, %vm273
    %v275 = vld [vmem:[%s271] sm:$0x1f]
    %v276 = vsel %vm274, %v213, %v275
    %277 = vst [vmem:[%s271] sm:$0x1f] %v276
    %v278 = vld [vmem:[%s271 + $0x8] sm:$0x1f]
    %v279 = vsel %vm274, %v220, %v278
    %280 = vst [vmem:[%s271 + $0x8] sm:$0x1f] %v279
    %v281 = vld [vmem:[%s271 + $0x10] sm:$0x1f]
    %v282 = vsel %vm274, %v227, %v281
    %283 = vst [vmem:[%s271 + $0x10] sm:$0x1f] %v282
    %v284 = vld [vmem:[%s271 + $0x18] sm:$0x1f]
    %v285 = vsel %vm274, %v234, %v284
    %286 = vst [vmem:[%s271 + $0x18] sm:$0x1f] %v285
    %v287 = vld [vmem:[%s271 + $0x20] sm:$0x1f]
    %v288 = vsel %vm274, %v241, %v287
    %289 = vst [vmem:[%s271 + $0x20] sm:$0x1f] %v288
    %v290 = vld [vmem:[%s271 + $0x28] sm:$0x1f]
    %v291 = vsel %vm274, %v248, %v290
    %292 = vst [vmem:[%s271 + $0x28] sm:$0x1f] %v291
    %v293 = vld [vmem:[%s271 + $0x30] sm:$0x1f]
    %v294 = vsel %vm274, %v255, %v293
    %295 = vst [vmem:[%s271 + $0x30] sm:$0x1f] %v294
    %v296 = vld [vmem:[%s271 + $0x38] sm:$0x1f]
    %v297 = vsel %vm274, %v262, %v296
    %298 = vst [vmem:[%s271 + $0x38] sm:$0x1f] %v297
    %v299 = vld [vmem:[#allocation2] sm:$0xff]
    %v300 = vld [vmem:[#allocation2 + $0x8] sm:$0xff]
    %v301 = vld [vmem:[#allocation2 + $0x10] sm:$0xff]
    %v302 = vld [vmem:[#allocation2 + $0x18] sm:$0xff]
    %v303 = vld [vmem:[#allocation2 + $0x20] sm:$0xff]
    %v304 = vld [vmem:[#allocation2 + $0x28] sm:$0xff]
    %v305 = vld [vmem:[#allocation2 + $0x30] sm:$0xff]
    %v306 = vld [vmem:[#allocation2 + $0x38] sm:$0xff]
    %v307 = vld [vmem:[#allocation2 + $0x40] sm:$0xff]
    %v308 = vld [vmem:[#allocation2 + $0x48] sm:$0xff]
    %v309 = vld [vmem:[#allocation2 + $0x50] sm:$0xff]
    %vm310 = vsmask.f32 7424
    %v312 = vshrl.u32 %v299, 16
    %v314 = vshll.u32 %v299, 16
    %v316 = vrot.slane %v314, 1
    %v317 = vor.u32 %v312, %v316
    %v319 = vshll.u32 %v300, 16
    %v321 = vrot.slane %v319, 1
    %v322 = vsel %vm310, %v317, %v321
    %v323 = vshrl.u32 %v300, 16
    %v325 = vor.u32 %v323, %v321
    %v327 = vshll.u32 %v301, 16
    %v329 = vrot.slane %v327, 1
    %v330 = vsel %vm310, %v325, %v329
    %v331 = vshrl.u32 %v301, 16
    %v333 = vor.u32 %v331, %v329
    %v335 = vshll.u32 %v302, 16
    %v337 = vrot.slane %v335, 1
    %v338 = vsel %vm310, %v333, %v337
    %v339 = vshrl.u32 %v302, 16
    %v341 = vor.u32 %v339, %v337
    %v343 = vshll.u32 %v303, 16
    %v345 = vrot.slane %v343, 1
    %v346 = vsel %vm310, %v341, %v345
    %v347 = vshrl.u32 %v303, 16
    %v349 = vor.u32 %v347, %v345
    %v351 = vshll.u32 %v304, 16
    %v353 = vrot.slane %v351, 1
    %v354 = vsel %vm310, %v349, %v353
    %v355 = vshrl.u32 %v304, 16
    %v357 = vor.u32 %v355, %v353
    %v359 = vshll.u32 %v305, 16
    %v361 = vrot.slane %v359, 1
    %v362 = vsel %vm310, %v357, %v361
    %v363 = vshrl.u32 %v305, 16
    %v365 = vor.u32 %v363, %v361
    %v367 = vshll.u32 %v306, 16
    %v369 = vrot.slane %v367, 1
    %v370 = vsel %vm310, %v365, %v369
    %v371 = vshrl.u32 %v306, 16
    %v373 = vor.u32 %v371, %v369
    %v375 = vshll.u32 %v307, 16
    %v377 = vrot.slane %v375, 1
    %v378 = vsel %vm310, %v373, %v377
    %v379 = vshrl.u32 %v307, 16
    %v381 = vor.u32 %v379, %v377
    %v383 = vshll.u32 %v308, 16
    %v385 = vrot.slane %v383, 1
    %v386 = vsel %vm310, %v381, %v385
    %v387 = vshrl.u32 %v308, 16
    %v389 = vor.u32 %v387, %v385
    %v391 = vshll.u32 %v309, 16
    %v393 = vrot.slane %v391, 1
    %v394 = vsel %vm310, %v389, %v393
    %395 = vrot.lane.b32.xlu0 %v322, 4
    %v396 = vpop.permute.xlu0 %395
    %397 = vrot.lane.b32.xlu0 %v330, 4
    %v398 = vpop.permute.xlu0 %397
    %399 = vrot.lane.b32.xlu0 %v338, 4
    %v400 = vpop.permute.xlu0 %399
    %401 = vrot.lane.b32.xlu0 %v346, 4
    %v402 = vpop.permute.xlu0 %401
    %403 = vrot.lane.b32.xlu0 %v354, 4
    %v404 = vpop.permute.xlu0 %403
    %405 = vrot.lane.b32.xlu0 %v362, 4
    %v406 = vpop.permute.xlu0 %405
    %407 = vrot.lane.b32.xlu0 %v370, 4
    %v408 = vpop.permute.xlu0 %407
    %409 = vrot.lane.b32.xlu0 %v378, 4
    %v410 = vpop.permute.xlu0 %409
    %411 = vrot.lane.b32.xlu0 %v386, 4
    %v412 = vpop.permute.xlu0 %411
    %413 = vrot.lane.b32.xlu0 %v394, 4
    %v414 = vpop.permute.xlu0 %413
    %vm426 = vcmask 1046528
    %v427 = vrot.slane %v299, 1
    %v428 = vrot.slane %v300, 1
    %v429 = vsel %vm426, %v427, %v428
    %v430 = vrot.slane %v301, 1
    %v431 = vsel %vm426, %v428, %v430
    %v432 = vrot.slane %v302, 1
    %v433 = vsel %vm426, %v430, %v432
    %v434 = vrot.slane %v303, 1
    %v435 = vsel %vm426, %v432, %v434
    %v436 = vrot.slane %v304, 1
    %v437 = vsel %vm426, %v434, %v436
    %v438 = vrot.slane %v305, 1
    %v439 = vsel %vm426, %v436, %v438
    %v440 = vrot.slane %v306, 1
    %v441 = vsel %vm426, %v438, %v440
    %v442 = vrot.slane %v307, 1
    %v443 = vsel %vm426, %v440, %v442
    %v444 = vrot.slane %v308, 1
    %v445 = vsel %vm426, %v442, %v444
    %v446 = vrot.slane %v309, 1
    %v447 = vsel %vm426, %v444, %v446
    %448 = vrot.lane.b32.xlu0 %v429, 8
    %v449 = vpop.permute.xlu0 %448
    %450 = vrot.lane.b32.xlu0 %v431, 8
    %v451 = vpop.permute.xlu0 %450
    %452 = vrot.lane.b32.xlu0 %v433, 8
    %v453 = vpop.permute.xlu0 %452
    %454 = vrot.lane.b32.xlu0 %v435, 8
    %v455 = vpop.permute.xlu0 %454
    %456 = vrot.lane.b32.xlu0 %v437, 8
    %v457 = vpop.permute.xlu0 %456
    %458 = vrot.lane.b32.xlu0 %v439, 8
    %v459 = vpop.permute.xlu0 %458
    %460 = vrot.lane.b32.xlu0 %v441, 8
    %v461 = vpop.permute.xlu0 %460
    %462 = vrot.lane.b32.xlu0 %v443, 8
    %v463 = vpop.permute.xlu0 %462
    %464 = vrot.lane.b32.xlu0 %v445, 8
    %v465 = vpop.permute.xlu0 %464
    %466 = vrot.lane.b32.xlu0 %v447, 8
    %v467 = vpop.permute.xlu0 %466
    %v469 = vsel %vm175, %v299, %v396
    %v471 = vsel %vm175, %v300, %v398
    %v473 = vsel %vm175, %v301, %v400
    %v475 = vsel %vm175, %v302, %v402
    %v477 = vsel %vm175, %v303, %v404
    %v479 = vsel %vm175, %v304, %v406
    %v481 = vsel %vm175, %v305, %v408
    %v483 = vsel %vm175, %v306, %v410
    %v485 = vsel %vm175, %v307, %v412
    %v487 = vsel %vm175, %v308, %v414
    %vm488 = vcmask 64512
    %v490 = vsel %vm488, %v469, %v449
    %v492 = vsel %vm488, %v471, %v451
    %v494 = vsel %vm488, %v473, %v453
    %v496 = vsel %vm488, %v475, %v455
    %v498 = vsel %vm488, %v477, %v457
    %v500 = vsel %vm488, %v479, %v459
    %v502 = vsel %vm488, %v481, %v461
    %v504 = vsel %vm488, %v483, %v463
    %v506 = vsel %vm488, %v485, %v465
    %v508 = vsel %vm488, %v487, %v467
    %v509 = vld [vmem:[%s3] sm:$0xf]
    %v510 = vld [vmem:[%s3 + $0x4] sm:$0x3]
    %s511 = scalar_lea.vmem %s3, 8
    %v512 = vld [vmem:[%s511] sm:$0xf]
    %v513 = vld [vmem:[%s511 + $0x4] sm:$0x3]
    %v516 = vunpack.c.l.b16 %v512
    %v517 = vunpack.c.l.b16 %v513
    %v518 = vpack.c.b16 %v517, %v516
    %vm519 = vcmask 97280
    %v520 = vsel %vm519, %v492, 0
    %v522 = vsel %vm519, %v494, 0
    %v524 = vsel %vm519, %v496, 0
    %v526 = vsel %vm519, %v498, 0
    %v528 = vsel %vm519, %v500, 0
    %v530 = vsel %vm519, %v502, 0
    %v532 = vsel %vm519, %v504, 0
    %v534 = vsel %vm519, %v506, 0
    %vm536 = vcmask 1045504
    %v538 = vsel %vm536, %v518, 0
    %540 = vmatprep.subr.bf16.mxu0 0
    %541 = vmatpush1.bf16.msra.mxu0 %v538
    %542 = vmatprep.subr.bf16.mxu0 0
    %543 = vmatpush1.bf16.msra.mxu0 0
    %544 = vmatprep.subr.bf16.mxu0 0
    %545 = vmatpush1.bf16.msra.mxu0 0
    %546 = vmatprep.subr.bf16.mxu0 0
    %547 = vmatpush1.bf16.msra.mxu0 0
    %548 = vmatprep.subr.bf16.mxu0 0
    %549 = vmatpush1.bf16.msra.mxu0 0
    %550 = vmatprep.subr.bf16.mxu0 0
    %551 = vmatpush1.bf16.msra.mxu0 0
    %552 = vmatprep.subr.bf16.mxu0 0
    %553 = vmatpush1.bf16.msra.mxu0 0
    %554 = vmatprep.subr.bf16.mxu0 0
    %555 = vmatpush1.bf16.msra.mxu0 0
    %556 = vmatprep.subr.bf16.mxu0 0
    %557 = vmatpush1.bf16.msra.mxu0 0
    %558 = vmatprep.subr.bf16.mxu0 0
    %559 = vmatpush1.bf16.msra.mxu0 0
    %560 = vmatprep.subr.bf16.mxu0 0
    %561 = vmatpush1.bf16.msra.mxu0 0
    %562 = vmatprep.subr.bf16.mxu0 0
    %563 = vmatpush1.bf16.msra.mxu0 0
    %564 = vmatprep.subr.bf16.mxu0 0
    %565 = vmatpush1.bf16.msra.mxu0 0
    %566 = vmatprep.subr.bf16.mxu0 0
    %567 = vmatpush1.bf16.msra.mxu0 0
    %568 = vmatprep.subr.bf16.mxu0 0
    %569 = vmatpush1.bf16.msra.mxu0 0
    %570 = vmatprep.subr.bf16.mxu0 0
    %571 = vmatpush1.bf16.msra.mxu0 0
    %572 = vmatprep.mubr.bf16.mxu0 0
    %573 = vmatmul.mubr.bf16.gmra.mrb[0].mxu0 %v520
    %v574 = vpop.f32.mrb[0].mxu0
    %v575 = vadd.f32 0.0, %v574
    %v576 = vpop.f32.mrb[0].mxu0
    %v577 = vpop.f32.mrb[0].mxu0
    %v578 = vadd.f32 0.0, %v577
    %v579 = vpop.f32.mrb[0].mxu0
    %580 = vmatprep.mubr.bf16.mxu0 0
    %581 = vmatmul.mubr.bf16.gmra.mrb[0].mxu0 %v522
    %v582 = vpop.f32.mrb[0].mxu0
    %v583 = vadd.f32 0.0, %v582
    %v584 = vpop.f32.mrb[0].mxu0
    %v585 = vpop.f32.mrb[0].mxu0
    %v586 = vadd.f32 0.0, %v585
    %v587 = vpop.f32.mrb[0].mxu0
    %588 = vmatprep.mubr.bf16.mxu0 0
    %589 = vmatmul.mubr.bf16.gmra.mrb[0].mxu0 %v524
    %v590 = vpop.f32.mrb[0].mxu0
    %v591 = vadd.f32 0.0, %v590
    %v592 = vpop.f32.mrb[0].mxu0
    %v593 = vpop.f32.mrb[0].mxu0
    %v594 = vadd.f32 0.0, %v593
    %v595 = vpop.f32.mrb[0].mxu0
    %596 = vmatprep.mubr.bf16.mxu0 0
    %597 = vmatmul.mubr.bf16.gmra.mrb[0].mxu0 %v526
    %v598 = vpop.f32.mrb[0].mxu0
    %v599 = vadd.f32 0.0, %v598
    %v600 = vpop.f32.mrb[0].mxu0
    %v601 = vpop.f32.mrb[0].mxu0
    %v602 = vadd.f32 0.0, %v601
    %v603 = vpop.f32.mrb[0].mxu0
    %604 = vmatprep.mubr.bf16.mxu0 0
    %605 = vmatmul.mubr.bf16.gmra.mrb[0].mxu0 %v528
    %v606 = vpop.f32.mrb[0].mxu0
    %v607 = vadd.f32 0.0, %v606
    %v608 = vpop.f32.mrb[0].mxu0
    %v609 = vpop.f32.mrb[0].mxu0
    %v610 = vadd.f32 0.0, %v609
    %v611 = vpop.f32.mrb[0].mxu0
    %612 = vmatprep.mubr.bf16.mxu0 0
    %613 = vmatmul.mubr.bf16.gmra.mrb[0].mxu0 %v530
    %v614 = vpop.f32.mrb[0].mxu0
    %v615 = vadd.f32 0.0, %v614
    %v616 = vpop.f32.mrb[0].mxu0
    %v617 = vpop.f32.mrb[0].mxu0
    %v618 = vadd.f32 0.0, %v617
    %v619 = vpop.f32.mrb[0].mxu0
    %620 = vmatprep.mubr.bf16.mxu0 0
    %621 = vmatmul.mubr.bf16.gmra.mrb[0].mxu0 %v532
    %v622 = vpop.f32.mrb[0].mxu0
    %v623 = vadd.f32 0.0, %v622
    %v624 = vpop.f32.mrb[0].mxu0
    %v625 = vpop.f32.mrb[0].mxu0
    %v626 = vadd.f32 0.0, %v625
    %v627 = vpop.f32.mrb[0].mxu0
    %628 = vmatprep.mubr.bf16.mxu0 0
    %629 = vmatmul.mubr.bf16.gmra.mrb[0].mxu0 %v534
    %v630 = vpop.f32.mrb[0].mxu0
    %v631 = vadd.f32 0.0, %v630
    %v632 = vpop.f32.mrb[0].mxu0
    %v633 = vpop.f32.mrb[0].mxu0
    %v634 = vadd.f32 0.0, %v633
    %v635 = vpop.f32.mrb[0].mxu0
    %636 = vdwg.mxu0
    %v639 = vunpack.c.l.b16 %v509
    %v640 = vunpack.c.l.b16 %v510
    %v641 = vpack.c.b16 %v640, %v639
    %v642 = vsel %vm519, %v490, 0
    %v645 = vsel %vm536, %v641, 0
    %647 = vmatprep.subr.bf16.mxu0 0
    %648 = vmatpush1.bf16.msra.mxu0 %v645
    %649 = vmatprep.subr.bf16.mxu0 0
    %650 = vmatpush1.bf16.msra.mxu0 0
    %651 = vmatprep.subr.bf16.mxu0 0
    %652 = vmatpush1.bf16.msra.mxu0 0
    %653 = vmatprep.subr.bf16.mxu0 0
    %654 = vmatpush1.bf16.msra.mxu0 0
    %655 = vmatprep.subr.bf16.mxu0 0
    %656 = vmatpush1.bf16.msra.mxu0 0
    %657 = vmatprep.subr.bf16.mxu0 0
    %658 = vmatpush1.bf16.msra.mxu0 0
    %659 = vmatprep.subr.bf16.mxu0 0
    %660 = vmatpush1.bf16.msra.mxu0 0
    %661 = vmatprep.subr.bf16.mxu0 0
    %662 = vmatpush1.bf16.msra.mxu0 0
    %663 = vmatprep.subr.bf16.mxu0 0
    %664 = vmatpush1.bf16.msra.mxu0 0
    %665 = vmatprep.subr.bf16.mxu0 0
    %666 = vmatpush1.bf16.msra.mxu0 0
    %667 = vmatprep.subr.bf16.mxu0 0
    %668 = vmatpush1.bf16.msra.mxu0 0
    %669 = vmatprep.subr.bf16.mxu0 0
    %670 = vmatpush1.bf16.msra.mxu0 0
    %671 = vmatprep.subr.bf16.mxu0 0
    %672 = vmatpush1.bf16.msra.mxu0 0
    %673 = vmatprep.subr.bf16.mxu0 0
    %674 = vmatpush1.bf16.msra.mxu0 0
    %675 = vmatprep.subr.bf16.mxu0 0
    %676 = vmatpush1.bf16.msra.mxu0 0
    %677 = vmatprep.subr.bf16.mxu0 0
    %678 = vmatpush1.bf16.msra.mxu0 0
    %679 = vmatprep.mubr.bf16.mxu0 0
    %680 = vmatmul.mubr.bf16.gmra.mrb[0].mxu0 %v642
    %v681 = vpop.f32.mrb[0].mxu0
    %v682 = vadd.f32 %v575, %v681
    %v683 = vpop.f32.mrb[0].mxu0
    %v684 = vpop.f32.mrb[0].mxu0
    %v685 = vadd.f32 %v578, %v684
    %v686 = vpop.f32.mrb[0].mxu0
    %687 = vmatprep.mubr.bf16.mxu0 0
    %688 = vmatmul.mubr.bf16.gmra.mrb[0].mxu0 %v520
    %v689 = vpop.f32.mrb[0].mxu0
    %v690 = vadd.f32 %v583, %v689
    %v691 = vpop.f32.mrb[0].mxu0
    %v692 = vpop.f32.mrb[0].mxu0
    %v693 = vadd.f32 %v586, %v692
    %v694 = vpop.f32.mrb[0].mxu0
    %695 = vmatprep.mubr.bf16.mxu0 0
    %696 = vmatmul.mubr.bf16.gmra.mrb[0].mxu0 %v522
    %v697 = vpop.f32.mrb[0].mxu0
    %v698 = vadd.f32 %v591, %v697
    %v699 = vpop.f32.mrb[0].mxu0
    %v700 = vpop.f32.mrb[0].mxu0
    %v701 = vadd.f32 %v594, %v700
    %v702 = vpop.f32.mrb[0].mxu0
    %703 = vmatprep.mubr.bf16.mxu0 0
    %704 = vmatmul.mubr.bf16.gmra.mrb[0].mxu0 %v524
    %v705 = vpop.f32.mrb[0].mxu0
    %v706 = vadd.f32 %v599, %v705
    %v707 = vpop.f32.mrb[0].mxu0
    %v708 = vpop.f32.mrb[0].mxu0
    %v709 = vadd.f32 %v602, %v708
    %v710 = vpop.f32.mrb[0].mxu0
    %711 = vmatprep.mubr.bf16.mxu0 0
    %712 = vmatmul.mubr.bf16.gmra.mrb[0].mxu0 %v526
    %v713 = vpop.f32.mrb[0].mxu0
    %v714 = vadd.f32 %v607, %v713
    %v715 = vpop.f32.mrb[0].mxu0
    %v716 = vpop.f32.mrb[0].mxu0
    %v717 = vadd.f32 %v610, %v716
    %v718 = vpop.f32.mrb[0].mxu0
    %719 = vmatprep.mubr.bf16.mxu0 0
    %720 = vmatmul.mubr.bf16.gmra.mrb[0].mxu0 %v528
    %v721 = vpop.f32.mrb[0].mxu0
    %v722 = vadd.f32 %v615, %v721
    %v723 = vpop.f32.mrb[0].mxu0
    %v724 = vpop.f32.mrb[0].mxu0
    %v725 = vadd.f32 %v618, %v724
    %v726 = vpop.f32.mrb[0].mxu0
    %727 = vmatprep.mubr.bf16.mxu0 0
    %728 = vmatmul.mubr.bf16.gmra.mrb[0].mxu0 %v530
    %v729 = vpop.f32.mrb[0].mxu0
    %v730 = vadd.f32 %v623, %v729
    %v731 = vpop.f32.mrb[0].mxu0
    %v732 = vpop.f32.mrb[0].mxu0
    %v733 = vadd.f32 %v626, %v732
    %v734 = vpop.f32.mrb[0].mxu0
    %735 = vmatprep.mubr.bf16.mxu0 0
    %736 = vmatmul.mubr.bf16.gmra.mrb[0].mxu0 %v532
    %v737 = vpop.f32.mrb[0].mxu0
    %v738 = vadd.f32 %v631, %v737
    %v739 = vpop.f32.mrb[0].mxu0
    %v740 = vpop.f32.mrb[0].mxu0
    %v741 = vadd.f32 %v634, %v740
    %v742 = vpop.f32.mrb[0].mxu0
    %743 = vdwg.mxu0
    %s744 = scalar_lea.vmem %s3, 16
    %v745 = vld [vmem:[%s744] sm:$0xf]
    %v746 = vld [vmem:[%s744 + $0x4] sm:$0x3]
    %v749 = vunpack.c.l.b16 %v745
    %v750 = vunpack.c.l.b16 %v746
    %v751 = vpack.c.b16 %v750, %v749
    %v752 = vsel %vm519, %v508, 0
    %v755 = vsel %vm536, %v751, 0
    %757 = vmatprep.subr.bf16.mxu0 0
    %758 = vmatpush1.bf16.msra.mxu0 %v755
    %759 = vmatprep.subr.bf16.mxu0 0
    %760 = vmatpush1.bf16.msra.mxu0 0
    %761 = vmatprep.subr.bf16.mxu0 0
    %762 = vmatpush1.bf16.msra.mxu0 0
    %763 = vmatprep.subr.bf16.mxu0 0
    %764 = vmatpush1.bf16.msra.mxu0 0
    %765 = vmatprep.subr.bf16.mxu0 0
    %766 = vmatpush1.bf16.msra.mxu0 0
    %767 = vmatprep.subr.bf16.mxu0 0
    %768 = vmatpush1.bf16.msra.mxu0 0
    %769 = vmatprep.subr.bf16.mxu0 0
    %770 = vmatpush1.bf16.msra.mxu0 0
    %771 = vmatprep.subr.bf16.mxu0 0
    %772 = vmatpush1.bf16.msra.mxu0 0
    %773 = vmatprep.subr.bf16.mxu0 0
    %774 = vmatpush1.bf16.msra.mxu0 0
    %775 = vmatprep.subr.bf16.mxu0 0
    %776 = vmatpush1.bf16.msra.mxu0 0
    %777 = vmatprep.subr.bf16.mxu0 0
    %778 = vmatpush1.bf16.msra.mxu0 0
    %779 = vmatprep.subr.bf16.mxu0 0
    %780 = vmatpush1.bf16.msra.mxu0 0
    %781 = vmatprep.subr.bf16.mxu0 0
    %782 = vmatpush1.bf16.msra.mxu0 0
    %783 = vmatprep.subr.bf16.mxu0 0
    %784 = vmatpush1.bf16.msra.mxu0 0
    %785 = vmatprep.subr.bf16.mxu0 0
    %786 = vmatpush1.bf16.msra.mxu0 0
    %787 = vmatprep.subr.bf16.mxu0 0
    %788 = vmatpush1.bf16.msra.mxu0 0
    %789 = vmatprep.mubr.bf16.mxu0 0
    %790 = vmatmul.mubr.bf16.gmra.mrb[0].mxu0 %v522
    %v791 = vpop.f32.mrb[0].mxu0
    %v792 = vadd.f32 0.0, %v791
    %v793 = vpop.f32.mrb[0].mxu0
    %v794 = vpop.f32.mrb[0].mxu0
    %v795 = vadd.f32 0.0, %v794
    %v796 = vpop.f32.mrb[0].mxu0
    %797 = vmatprep.mubr.bf16.mxu0 0
    %798 = vmatmul.mubr.bf16.gmra.mrb[0].mxu0 %v524
    %v799 = vpop.f32.mrb[0].mxu0
    %v800 = vadd.f32 0.0, %v799
    %v801 = vpop.f32.mrb[0].mxu0
    %v802 = vpop.f32.mrb[0].mxu0
    %v803 = vadd.f32 0.0, %v802
    %v804 = vpop.f32.mrb[0].mxu0
    %805 = vmatprep.mubr.bf16.mxu0 0
    %806 = vmatmul.mubr.bf16.gmra.mrb[0].mxu0 %v526
    %v807 = vpop.f32.mrb[0].mxu0
    %v808 = vadd.f32 0.0, %v807
    %v809 = vpop.f32.mrb[0].mxu0
    %v810 = vpop.f32.mrb[0].mxu0
    %v811 = vadd.f32 0.0, %v810
    %v812 = vpop.f32.mrb[0].mxu0
    %813 = vmatprep.mubr.bf16.mxu0 0
    %814 = vmatmul.mubr.bf16.gmra.mrb[0].mxu0 %v528
    %v815 = vpop.f32.mrb[0].mxu0
    %v816 = vadd.f32 0.0, %v815
    %v817 = vpop.f32.mrb[0].mxu0
    %v818 = vpop.f32.mrb[0].mxu0
    %v819 = vadd.f32 0.0, %v818
    %v820 = vpop.f32.mrb[0].mxu0
    %821 = vmatprep.mubr.bf16.mxu0 0
    %822 = vmatmul.mubr.bf16.gmra.mrb[0].mxu0 %v530
    %v823 = vpop.f32.mrb[0].mxu0
    %v824 = vadd.f32 0.0, %v823
    %v825 = vpop.f32.mrb[0].mxu0
    %v826 = vpop.f32.mrb[0].mxu0
    %v827 = vadd.f32 0.0, %v826
    %v828 = vpop.f32.mrb[0].mxu0
    %829 = vmatprep.mubr.bf16.mxu0 0
    %830 = vmatmul.mubr.bf16.gmra.mrb[0].mxu0 %v532
    %v831 = vpop.f32.mrb[0].mxu0
    %v832 = vadd.f32 0.0, %v831
    %v833 = vpop.f32.mrb[0].mxu0
    %v834 = vpop.f32.mrb[0].mxu0
    %v835 = vadd.f32 0.0, %v834
    %v836 = vpop.f32.mrb[0].mxu0
    %837 = vmatprep.mubr.bf16.mxu0 0
    %838 = vmatmul.mubr.bf16.gmra.mrb[0].mxu0 %v534
    %v839 = vpop.f32.mrb[0].mxu0
    %v840 = vadd.f32 0.0, %v839
    %v841 = vpop.f32.mrb[0].mxu0
    %v842 = vpop.f32.mrb[0].mxu0
    %v843 = vadd.f32 0.0, %v842
    %v844 = vpop.f32.mrb[0].mxu0
    %845 = vmatprep.mubr.bf16.mxu0 0
    %846 = vmatmul.mubr.bf16.gmra.mrb[0].mxu0 %v752
    %v847 = vpop.f32.mrb[0].mxu0
    %v848 = vadd.f32 0.0, %v847
    %v849 = vpop.f32.mrb[0].mxu0
    %v850 = vpop.f32.mrb[0].mxu0
    %v851 = vadd.f32 0.0, %v850
    %v852 = vpop.f32.mrb[0].mxu0
    %853 = vdwg.mxu0
    %v854 = vadd.f32 %v682, %v792
    %v855 = vadd.f32 %v685, %v795
    %v856 = vadd.f32 %v690, %v800
    %v857 = vadd.f32 %v693, %v803
    %v858 = vadd.f32 %v698, %v808
    %v859 = vadd.f32 %v701, %v811
    %v860 = vadd.f32 %v706, %v816
    %v861 = vadd.f32 %v709, %v819
    %v862 = vadd.f32 %v714, %v824
    %v863 = vadd.f32 %v717, %v827
    %v864 = vadd.f32 %v722, %v832
    %v865 = vadd.f32 %v725, %v835
    %v866 = vadd.f32 %v730, %v840
    %v867 = vadd.f32 %v733, %v843
    %v868 = vadd.f32 %v738, %v848
    %v869 = vadd.f32 %v741, %v851
    %v870 = vld [vmem:[%s4] sm:$0x1]
    %v872 = vlaneseq
    %v873 = vshrl.u32 %v872, 7
    %v874 = vsub.s32 0, %v873
    %v875 = vrot.slane %v870, %v874
    %v877 = vadd.f32 %v854, %v875
    %v878 = vadd.f32 %v855, %v875
    %v879 = vadd.f32 %v856, %v875
    %v880 = vadd.f32 %v857, %v875
    %v881 = vadd.f32 %v858, %v875
    %v882 = vadd.f32 %v859, %v875
    %v883 = vadd.f32 %v860, %v875
    %v884 = vadd.f32 %v861, %v875
    %v885 = vadd.f32 %v862, %v875
    %v886 = vadd.f32 %v863, %v875
    %v887 = vadd.f32 %v864, %v875
    %v888 = vadd.f32 %v865, %v875
    %v889 = vadd.f32 %v866, %v875
    %v890 = vadd.f32 %v867, %v875
    %v891 = vadd.f32 %v868, %v875
    %v892 = vadd.f32 %v869, %v875
    %v893 = vmax.f32 %v877, 0.0
    %v894 = vmax.f32 %v878, 0.0
    %v895 = vmax.f32 %v879, 0.0
    %v896 = vmax.f32 %v880, 0.0
    %v897 = vmax.f32 %v881, 0.0
    %v898 = vmax.f32 %v882, 0.0
    %v899 = vmax.f32 %v883, 0.0
    %v900 = vmax.f32 %v884, 0.0
    %v901 = vmax.f32 %v885, 0.0
    %v902 = vmax.f32 %v886, 0.0
    %v903 = vmax.f32 %v887, 0.0
    %v904 = vmax.f32 %v888, 0.0
    %v905 = vmax.f32 %v889, 0.0
    %v906 = vmax.f32 %v890, 0.0
    %v907 = vmax.f32 %v891, 0.0
    %v908 = vmax.f32 %v892, 0.0
    %v909 = vpack.c.bf16 %v894, %v893
    %v910 = vpack.c.bf16 %v896, %v895
    %v911 = vpack.c.bf16 %v898, %v897
    %v912 = vpack.c.bf16 %v900, %v899
    %v913 = vpack.c.bf16 %v902, %v901
    %v914 = vpack.c.bf16 %v904, %v903
    %v915 = vpack.c.bf16 %v906, %v905
    %v916 = vpack.c.bf16 %v908, %v907
    %v917 = vld [vmem:[%s5] sm:$0x3]
    %v918 = vld [vmem:[%s6] sm:$0x1]
    %v920 = vlaneseq
    %v921 = vshrl.u32 %v920, 7
    %v922 = vsub.s32 0, %v921
    %v923 = vrot.slane %v918, %v922
    %v933 = vunpack.c.l.b16 %v909
    %v934 = vunpack.c.l.b16 %v910
    %v935 = vunpack.c.l.b16 %v911
    %v936 = vunpack.c.l.b16 %v912
    %v937 = vunpack.c.l.b16 %v913
    %v938 = vunpack.c.l.b16 %v914
    %v939 = vunpack.c.l.b16 %v915
    %v940 = vunpack.c.l.b16 %v916
    %v941 = vpack.c.b16 %v934, %v933
    %v942 = vpack.c.b16 %v936, %v935
    %v943 = vpack.c.b16 %v938, %v937
    %v944 = vpack.c.b16 %v940, %v939
    %v946 = vsel %vm175, %v941, 0
    %v949 = vsel %vm175, %v942, 0
    %v952 = vsel %vm175, %v943, 0
    %v955 = vsel %vm175, %v944, 0
    %vm957 = vcmask 1041408
    %v959 = vsel %vm957, %v917, 0
    %961 = vmatprep.subr.bf16.mxu0 0
    %962 = vmatpush1.bf16.msra.mxu0 %v959
    %963 = vmatprep.subr.bf16.mxu0 0
    %964 = vmatpush1.bf16.msra.mxu0 0
    %965 = vmatprep.subr.bf16.mxu0 0
    %966 = vmatpush1.bf16.msra.mxu0 0
    %967 = vmatprep.subr.bf16.mxu0 0
    %968 = vmatpush1.bf16.msra.mxu0 0
    %969 = vmatprep.subr.bf16.mxu0 0
    %970 = vmatpush1.bf16.msra.mxu0 0
    %971 = vmatprep.subr.bf16.mxu0 0
    %972 = vmatpush1.bf16.msra.mxu0 0
    %973 = vmatprep.subr.bf16.mxu0 0
    %974 = vmatpush1.bf16.msra.mxu0 0
    %975 = vmatprep.subr.bf16.mxu0 0
    %976 = vmatpush1.bf16.msra.mxu0 0
    %977 = vmatprep.subr.bf16.mxu0 0
    %978 = vmatpush1.bf16.msra.mxu0 0
    %979 = vmatprep.subr.bf16.mxu0 0
    %980 = vmatpush1.bf16.msra.mxu0 0
    %981 = vmatprep.subr.bf16.mxu0 0
    %982 = vmatpush1.bf16.msra.mxu0 0
    %983 = vmatprep.subr.bf16.mxu0 0
    %984 = vmatpush1.bf16.msra.mxu0 0
    %985 = vmatprep.subr.bf16.mxu0 0
    %986 = vmatpush1.bf16.msra.mxu0 0
    %987 = vmatprep.subr.bf16.mxu0 0
    %988 = vmatpush1.bf16.msra.mxu0 0
    %989 = vmatprep.subr.bf16.mxu0 0
    %990 = vmatpush1.bf16.msra.mxu0 0
    %991 = vmatprep.subr.bf16.mxu0 0
    %992 = vmatpush1.bf16.msra.mxu0 0
    %993 = vmatprep.mubr.bf16.mxu0 0
    %994 = vmatmul.mubr.bf16.gmra.mrb[0].mxu0 %v946
    %v995 = vpop.f32.mrb[0].mxu0
    %v996 = vadd.f32 %v923, %v995
    %v997 = vpop.f32.mrb[0].mxu0
    %v998 = vpop.f32.mrb[0].mxu0
    %v999 = vadd.f32 %v923, %v998
    %v1000 = vpop.f32.mrb[0].mxu0
    %1001 = vmatprep.mubr.bf16.mxu0 0
    %1002 = vmatmul.mubr.bf16.gmra.mrb[0].mxu0 %v949
    %v1003 = vpop.f32.mrb[0].mxu0
    %v1004 = vadd.f32 %v923, %v1003
    %v1005 = vpop.f32.mrb[0].mxu0
    %v1006 = vpop.f32.mrb[0].mxu0
    %v1007 = vadd.f32 %v923, %v1006
    %v1008 = vpop.f32.mrb[0].mxu0
    %1009 = vmatprep.mubr.bf16.mxu0 0
    %1010 = vmatmul.mubr.bf16.gmra.mrb[0].mxu0 %v952
    %v1011 = vpop.f32.mrb[0].mxu0
    %v1012 = vadd.f32 %v923, %v1011
    %v1013 = vpop.f32.mrb[0].mxu0
    %v1014 = vpop.f32.mrb[0].mxu0
    %v1015 = vadd.f32 %v923, %v1014
    %v1016 = vpop.f32.mrb[0].mxu0
    %1017 = vmatprep.mubr.bf16.mxu0 0
    %1018 = vmatmul.mubr.bf16.gmra.mrb[0].mxu0 %v955
    %v1019 = vpop.f32.mrb[0].mxu0
    %v1020 = vadd.f32 %v923, %v1019
    %v1021 = vpop.f32.mrb[0].mxu0
    %v1022 = vpop.f32.mrb[0].mxu0
    %v1023 = vadd.f32 %v923, %v1022
    %v1024 = vpop.f32.mrb[0].mxu0
    %1025 = vdwg.mxu0
    %v1026 = vpack.c.bf16 %v999, %v996
    %v1027 = vpack.c.bf16 %v1007, %v1004
    %v1028 = vpack.c.bf16 %v1015, %v1012
    %v1029 = vpack.c.bf16 %v1023, %v1020
    %v1034 = vunpack.c.l.b16 %v1026
    %v1035 = vunpack.c.h.b16 %v1026
    %v1036 = vunpack.c.l.b16 %v1027
    %v1037 = vunpack.c.h.b16 %v1027
    %v1038 = vunpack.c.l.b16 %v1028
    %v1039 = vunpack.c.h.b16 %v1028
    %v1040 = vunpack.c.l.b16 %v1029
    %v1041 = vunpack.c.h.b16 %v1029
    %v1042 = vpack.c.b16 %v1034, %v1034
    %v1043 = vpack.c.b16 %v1035, %v1035
    %v1044 = vpack.c.b16 %v1036, %v1036
    %v1045 = vpack.c.b16 %v1037, %v1037
    %v1046 = vpack.c.b16 %v1038, %v1038
    %v1047 = vpack.c.b16 %v1039, %v1039
    %v1048 = vpack.c.b16 %v1040, %v1040
    %v1049 = vpack.c.b16 %v1041, %v1041
    %v1058 = vadd.bf16 %v1042, %v42
    %v1059 = vadd.bf16 %v1043, %v43
    %v1060 = vadd.bf16 %v1044, %v44
    %v1061 = vadd.bf16 %v1045, %v45
    %v1062 = vadd.bf16 %v1046, %v46
    %v1063 = vadd.bf16 %v1047, %v47
    %v1064 = vadd.bf16 %v1048, %v48
    %v1065 = vadd.bf16 %v1049, %v49
    %v1066 = vmax.bf16 %v1058, 0
    %v1067 = vmax.bf16 %v1059, 0
    %v1068 = vmax.bf16 %v1060, 0
    %v1069 = vmax.bf16 %v1061, 0
    %v1070 = vmax.bf16 %v1062, 0
    %v1071 = vmax.bf16 %v1063, 0
    %v1072 = vmax.bf16 %v1064, 0
    %v1073 = vmax.bf16 %v1065, 0
    %vm1074 = vcmask 125952
    %1075 = vst.msk [vmem:[#allocation6] sm:$0xf] %vm1074, %v1066
    %1076 = vst.msk [vmem:[#allocation6 + $0x4] sm:$0xf] %vm1074, %v1067
    %1077 = vst.msk [vmem:[#allocation6 + $0x8] sm:$0xf] %vm1074, %v1068
    %1078 = vst.msk [vmem:[#allocation6 + $0xc] sm:$0xf] %vm1074, %v1069
    %1079 = vst.msk [vmem:[#allocation6 + $0x10] sm:$0xf] %vm1074, %v1070
    %1080 = vst.msk [vmem:[#allocation6 + $0x14] sm:$0xf] %vm1074, %v1071
    %1081 = vst.msk [vmem:[#allocation6 + $0x18] sm:$0xf] %vm1074, %v1072
    %1082 = vst.msk [vmem:[#allocation6 + $0x1c] sm:$0xf] %vm1074, %v1073
    %s1083 = scalar_lea.vmem [#allocation3], 32
    %v1084 = vld [vmem:[%s1083] sm:$0xf]
    %v1085 = vld [vmem:[%s1083 + $0x4] sm:$0xf]
    %v1086 = vld [vmem:[%s1083 + $0x8] sm:$0xf]
    %v1087 = vld [vmem:[%s1083 + $0xc] sm:$0xf]
    %v1088 = vld [vmem:[%s1083 + $0x10] sm:$0xf]
    %v1089 = vld [vmem:[%s1083 + $0x14] sm:$0xf]
    %v1090 = vld [vmem:[%s1083 + $0x18] sm:$0xf]
    %v1091 = vld [vmem:[%s1083 + $0x1c] sm:$0xf]
    %v1092 = vld [vmem:[%s1] sm:$0xf]
    %v1093 = vld [vmem:[%s1 + $0x4] sm:$0xf]
    %v1094 = vld [vmem:[%s2] sm:$0x1]
    %v1096 = vlaneseq
    %v1097 = vshrl.u32 %v1096, 7
    %v1098 = vsub.s32 0, %v1097
    %v1099 = vrot.slane %v1094, %v1098
    %v1109 = vunpack.c.l.b16 %v1084
    %v1110 = vunpack.c.l.b16 %v1085
    %v1111 = vunpack.c.l.b16 %v1086
    %v1112 = vunpack.c.l.b16 %v1087
    %v1113 = vunpack.c.l.b16 %v1088
    %v1114 = vunpack.c.l.b16 %v1089
    %v1115 = vunpack.c.l.b16 %v1090
    %v1116 = vunpack.c.l.b16 %v1091
    %v1117 = vpack.c.b16 %v1110, %v1109
    %v1118 = vpack.c.b16 %v1112, %v1111
    %v1119 = vpack.c.b16 %v1114, %v1113
    %v1120 = vpack.c.b16 %v1116, %v1115
    %v1123 = vunpack.c.l.b16 %v1092
    %v1124 = vunpack.c.l.b16 %v1093
    %v1125 = vpack.c.b16 %v1124, %v1123
    %v1128 = vsel %vm85, %v1117, 0
    %v1131 = vsel %vm85, %v1118, 0
    %v1134 = vsel %vm85, %v1119, 0
    %v1137 = vsel %vm85, %v1120, 0
    %1139 = vmatprep.subr.bf16.mxu0 0
    %1140 = vmatpush1.bf16.msra.mxu0 %v1125
    %1141 = vmatprep.subr.bf16.mxu0 0
    %1142 = vmatpush1.bf16.msra.mxu0 0
    %1143 = vmatprep.subr.bf16.mxu0 0
    %1144 = vmatpush1.bf16.msra.mxu0 0
    %1145 = vmatprep.subr.bf16.mxu0 0
    %1146 = vmatpush1.bf16.msra.mxu0 0
    %1147 = vmatprep.subr.bf16.mxu0 0
    %1148 = vmatpush1.bf16.msra.mxu0 0
    %1149 = vmatprep.subr.bf16.mxu0 0
    %1150 = vmatpush1.bf16.msra.mxu0 0
    %1151 = vmatprep.subr.bf16.mxu0 0
    %1152 = vmatpush1.bf16.msra.mxu0 0
    %1153 = vmatprep.subr.bf16.mxu0 0
    %1154 = vmatpush1.bf16.msra.mxu0 0
    %1155 = vmatprep.subr.bf16.mxu0 0
    %1156 = vmatpush1.bf16.msra.mxu0 0
    %1157 = vmatprep.subr.bf16.mxu0 0
    %1158 = vmatpush1.bf16.msra.mxu0 0
    %1159 = vmatprep.subr.bf16.mxu0 0
    %1160 = vmatpush1.bf16.msra.mxu0 0
    %1161 = vmatprep.subr.bf16.mxu0 0
    %1162 = vmatpush1.bf16.msra.mxu0 0
    %1163 = vmatprep.subr.bf16.mxu0 0
    %1164 = vmatpush1.bf16.msra.mxu0 0
    %1165 = vmatprep.subr.bf16.mxu0 0
    %1166 = vmatpush1.bf16.msra.mxu0 0
    %1167 = vmatprep.subr.bf16.mxu0 0
    %1168 = vmatpush1.bf16.msra.mxu0 0
    %1169 = vmatprep.subr.bf16.mxu0 0
    %1170 = vmatpush1.bf16.msra.mxu0 0
    %1171 = vmatprep.mubr.bf16.mxu0 0
    %1172 = vmatmul.mubr.bf16.gmra.mrb[0].mxu0 %v1128
    %v1173 = vpop.f32.mrb[0].mxu0
    %v1174 = vadd.f32 %v1099, %v1173
    %v1175 = vpop.f32.mrb[0].mxu0
    %v1176 = vpop.f32.mrb[0].mxu0
    %v1177 = vadd.f32 %v1099, %v1176
    %v1178 = vpop.f32.mrb[0].mxu0
    %1179 = vmatprep.mubr.bf16.mxu0 0
    %1180 = vmatmul.mubr.bf16.gmra.mrb[0].mxu0 %v1131
    %v1181 = vpop.f32.mrb[0].mxu0
    %v1182 = vadd.f32 %v1099, %v1181
    %v1183 = vpop.f32.mrb[0].mxu0
    %v1184 = vpop.f32.mrb[0].mxu0
    %v1185 = vadd.f32 %v1099, %v1184
    %v1186 = vpop.f32.mrb[0].mxu0
    %1187 = vmatprep.mubr.bf16.mxu0 0
    %1188 = vmatmul.mubr.bf16.gmra.mrb[0].mxu0 %v1134
    %v1189 = vpop.f32.mrb[0].mxu0
    %v1190 = vadd.f32 %v1099, %v1189
    %v1191 = vpop.f32.mrb[0].mxu0
    %v1192 = vpop.f32.mrb[0].mxu0
    %v1193 = vadd.f32 %v1099, %v1192
    %v1194 = vpop.f32.mrb[0].mxu0
    %1195 = vmatprep.mubr.bf16.mxu0 0
    %1196 = vmatmul.mubr.bf16.gmra.mrb[0].mxu0 %v1137
    %v1197 = vpop.f32.mrb[0].mxu0
    %v1198 = vadd.f32 %v1099, %v1197
    %v1199 = vpop.f32.mrb[0].mxu0
    %v1200 = vpop.f32.mrb[0].mxu0
    %v1201 = vadd.f32 %v1099, %v1200
    %v1202 = vpop.f32.mrb[0].mxu0
    %1203 = vdwg.mxu0
    %v1204 = vmax.f32 %v1174, 0.0
    %v1205 = vmax.f32 %v1177, 0.0
    %v1206 = vmax.f32 %v1182, 0.0
    %v1207 = vmax.f32 %v1185, 0.0
    %v1208 = vmax.f32 %v1190, 0.0
    %v1209 = vmax.f32 %v1193, 0.0
    %v1210 = vmax.f32 %v1198, 0.0
    %v1211 = vmax.f32 %v1201, 0.0
    %v1212 = vpack.c.bf16 %v1205, %v1204
    %v1213 = vpack.c.bf16 %v1207, %v1206
    %v1214 = vpack.c.bf16 %v1209, %v1208
    %v1215 = vpack.c.bf16 %v1211, %v1210
    %1216 = vst.msk [vmem:[#allocation2] sm:$0xff] %vm175, 0
    %1217 = vst.msk [vmem:[#allocation2 + $0x8] sm:$0xff] %vm175, 0
    %1218 = vst.msk [vmem:[#allocation2 + $0x10] sm:$0xff] %vm175, 0
    %1219 = vst.msk [vmem:[#allocation2 + $0x18] sm:$0xff] %vm175, 0
    %1220 = vst.msk [vmem:[#allocation2 + $0x20] sm:$0xff] %vm175, 0
    %1221 = vst.msk [vmem:[#allocation2 + $0x28] sm:$0xff] %vm175, 0
    %1222 = vst.msk [vmem:[#allocation2 + $0x30] sm:$0xff] %vm175, 0
    %1223 = vst.msk [vmem:[#allocation2 + $0x38] sm:$0xff] %vm175, 0
    %1224 = vst.msk [vmem:[#allocation2 + $0x40] sm:$0xff] %vm175, 0
    %1225 = vst.msk [vmem:[#allocation2 + $0x48] sm:$0xff] %vm175, 0
    %1226 = vst.msk [vmem:[#allocation2 + $0x50] sm:$0xff] %vm175, 0
    %v1231 = vunpack.c.l.b16 %v1212
    %v1232 = vunpack.c.h.b16 %v1212
    %v1233 = vunpack.c.l.b16 %v1213
    %v1234 = vunpack.c.h.b16 %v1213
    %v1235 = vunpack.c.l.b16 %v1214
    %v1236 = vunpack.c.h.b16 %v1214
    %v1237 = vunpack.c.l.b16 %v1215
    %v1238 = vunpack.c.h.b16 %v1215
    %v1239 = vpack.c.b16 %v1231, %v1231
    %v1240 = vpack.c.b16 %v1232, %v1232
    %v1241 = vpack.c.b16 %v1233, %v1233
    %v1242 = vpack.c.b16 %v1234, %v1234
    %v1243 = vpack.c.b16 %v1235, %v1235
    %v1244 = vpack.c.b16 %v1236, %v1236
    %v1245 = vpack.c.b16 %v1237, %v1237
    %v1246 = vpack.c.b16 %v1238, %v1238
    %v1248 = vshrl.u32 %v1239, 16
    %v1250 = vrot.slane %v1248, 7
    %v1251 = vshll.u32 %v1239, 16
    %v1253 = vor.u32 %v1250, %v1251
    %v1255 = vshrl.u32 %v1240, 16
    %v1257 = vrot.slane %v1255, 7
    %v1258 = vshll.u32 %v1240, 16
    %v1260 = vor.u32 %v1257, %v1258
    %v1262 = vshrl.u32 %v1241, 16
    %v1264 = vrot.slane %v1262, 7
    %v1265 = vshll.u32 %v1241, 16
    %v1267 = vor.u32 %v1264, %v1265
    %v1269 = vshrl.u32 %v1242, 16
    %v1271 = vrot.slane %v1269, 7
    %v1272 = vshll.u32 %v1242, 16
    %v1274 = vor.u32 %v1271, %v1272
    %v1276 = vshrl.u32 %v1243, 16
    %v1278 = vrot.slane %v1276, 7
    %v1279 = vshll.u32 %v1243, 16
    %v1281 = vor.u32 %v1278, %v1279
    %v1283 = vshrl.u32 %v1244, 16
    %v1285 = vrot.slane %v1283, 7
    %v1286 = vshll.u32 %v1244, 16
    %v1288 = vor.u32 %v1285, %v1286
    %v1290 = vshrl.u32 %v1245, 16
    %v1292 = vrot.slane %v1290, 7
    %v1293 = vshll.u32 %v1245, 16
    %v1295 = vor.u32 %v1292, %v1293
    %v1297 = vshrl.u32 %v1246, 16
    %v1299 = vrot.slane %v1297, 7
    %v1300 = vshll.u32 %v1246, 16
    %v1302 = vor.u32 %v1299, %v1300
    %v1311 = vld [vmem:[%s271] sm:$0x1f]
    %v1312 = vsel %vm274, %v1253, %v1311
    %1313 = vst [vmem:[%s271] sm:$0x1f] %v1312
    %v1314 = vld [vmem:[%s271 + $0x8] sm:$0x1f]
    %v1315 = vsel %vm274, %v1260, %v1314
    %1316 = vst [vmem:[%s271 + $0x8] sm:$0x1f] %v1315
    %v1317 = vld [vmem:[%s271 + $0x10] sm:$0x1f]
    %v1318 = vsel %vm274, %v1267, %v1317
    %1319 = vst [vmem:[%s271 + $0x10] sm:$0x1f] %v1318
    %v1320 = vld [vmem:[%s271 + $0x18] sm:$0x1f]
    %v1321 = vsel %vm274, %v1274, %v1320
    %1322 = vst [vmem:[%s271 + $0x18] sm:$0x1f] %v1321
    %v1323 = vld [vmem:[%s271 + $0x20] sm:$0x1f]
    %v1324 = vsel %vm274, %v1281, %v1323
    %1325 = vst [vmem:[%s271 + $0x20] sm:$0x1f] %v1324
    %v1326 = vld [vmem:[%s271 + $0x28] sm:$0x1f]
    %v1327 = vsel %vm274, %v1288, %v1326
    %1328 = vst [vmem:[%s271 + $0x28] sm:$0x1f] %v1327
    %v1329 = vld [vmem:[%s271 + $0x30] sm:$0x1f]
    %v1330 = vsel %vm274, %v1295, %v1329
    %1331 = vst [vmem:[%s271 + $0x30] sm:$0x1f] %v1330
    %v1332 = vld [vmem:[%s271 + $0x38] sm:$0x1f]
    %v1333 = vsel %vm274, %v1302, %v1332
    %1334 = vst [vmem:[%s271 + $0x38] sm:$0x1f] %v1333
    %v1335 = vld [vmem:[#allocation2] sm:$0xff]
    %v1336 = vld [vmem:[#allocation2 + $0x8] sm:$0xff]
    %v1337 = vld [vmem:[#allocation2 + $0x10] sm:$0xff]
    %v1338 = vld [vmem:[#allocation2 + $0x18] sm:$0xff]
    %v1339 = vld [vmem:[#allocation2 + $0x20] sm:$0xff]
    %v1340 = vld [vmem:[#allocation2 + $0x28] sm:$0xff]
    %v1341 = vld [vmem:[#allocation2 + $0x30] sm:$0xff]
    %v1342 = vld [vmem:[#allocation2 + $0x38] sm:$0xff]
    %v1343 = vld [vmem:[#allocation2 + $0x40] sm:$0xff]
    %v1344 = vld [vmem:[#allocation2 + $0x48] sm:$0xff]
    %v1345 = vld [vmem:[#allocation2 + $0x50] sm:$0xff]
    %v1347 = vshrl.u32 %v1335, 16
    %v1349 = vshll.u32 %v1335, 16
    %v1351 = vrot.slane %v1349, 1
    %v1352 = vor.u32 %v1347, %v1351
    %v1354 = vshll.u32 %v1336, 16
    %v1356 = vrot.slane %v1354, 1
    %v1357 = vsel %vm310, %v1352, %v1356
    %v1358 = vshrl.u32 %v1336, 16
    %v1360 = vor.u32 %v1358, %v1356
    %v1362 = vshll.u32 %v1337, 16
    %v1364 = vrot.slane %v1362, 1
    %v1365 = vsel %vm310, %v1360, %v1364
    %v1366 = vshrl.u32 %v1337, 16
    %v1368 = vor.u32 %v1366, %v1364
    %v1370 = vshll.u32 %v1338, 16
    %v1372 = vrot.slane %v1370, 1
    %v1373 = vsel %vm310, %v1368, %v1372
    %v1374 = vshrl.u32 %v1338, 16
    %v1376 = vor.u32 %v1374, %v1372
    %v1378 = vshll.u32 %v1339, 16
    %v1380 = vrot.slane %v1378, 1
    %v1381 = vsel %vm310, %v1376, %v1380
    %v1382 = vshrl.u32 %v1339, 16
    %v1384 = vor.u32 %v1382, %v1380
    %v1386 = vshll.u32 %v1340, 16
    %v1388 = vrot.slane %v1386, 1
    %v1389 = vsel %vm310, %v1384, %v1388
    %v1390 = vshrl.u32 %v1340, 16
    %v1392 = vor.u32 %v1390, %v1388
    %v1394 = vshll.u32 %v1341, 16
    %v1396 = vrot.slane %v1394, 1
    %v1397 = vsel %vm310, %v1392, %v1396
    %v1398 = vshrl.u32 %v1341, 16
    %v1400 = vor.u32 %v1398, %v1396
    %v1402 = vshll.u32 %v1342, 16
    %v1404 = vrot.slane %v1402, 1
    %v1405 = vsel %vm310, %v1400, %v1404
    %v1406 = vshrl.u32 %v1342, 16
    %v1408 = vor.u32 %v1406, %v1404
    %v1410 = vshll.u32 %v1343, 16
    %v1412 = vrot.slane %v1410, 1
    %v1413 = vsel %vm310, %v1408, %v1412
    %v1414 = vshrl.u32 %v1343, 16
    %v1416 = vor.u32 %v1414, %v1412
    %v1418 = vshll.u32 %v1344, 16
    %v1420 = vrot.slane %v1418, 1
    %v1421 = vsel %vm310, %v1416, %v1420
    %v1422 = vshrl.u32 %v1344, 16
    %v1424 = vor.u32 %v1422, %v1420
    %v1426 = vshll.u32 %v1345, 16
    %v1428 = vrot.slane %v1426, 1
    %v1429 = vsel %vm310, %v1424, %v1428
    %1430 = vrot.lane.b32.xlu0 %v1357, 4
    %v1431 = vpop.permute.xlu0 %1430
    %1432 = vrot.lane.b32.xlu0 %v1365, 4
    %v1433 = vpop.permute.xlu0 %1432
    %1434 = vrot.lane.b32.xlu0 %v1373, 4
    %v1435 = vpop.permute.xlu0 %1434
    %1436 = vrot.lane.b32.xlu0 %v1381, 4
    %v1437 = vpop.permute.xlu0 %1436
    %1438 = vrot.lane.b32.xlu0 %v1389, 4
    %v1439 = vpop.permute.xlu0 %1438
    %1440 = vrot.lane.b32.xlu0 %v1397, 4
    %v1441 = vpop.permute.xlu0 %1440
    %1442 = vrot.lane.b32.xlu0 %v1405, 4
    %v1443 = vpop.permute.xlu0 %1442
    %1444 = vrot.lane.b32.xlu0 %v1413, 4
    %v1445 = vpop.permute.xlu0 %1444
    %1446 = vrot.lane.b32.xlu0 %v1421, 4
    %v1447 = vpop.permute.xlu0 %1446
    %1448 = vrot.lane.b32.xlu0 %v1429, 4
    %v1449 = vpop.permute.xlu0 %1448
    %v1461 = vrot.slane %v1335, 1
    %v1462 = vrot.slane %v1336, 1
    %v1463 = vsel %vm426, %v1461, %v1462
    %v1464 = vrot.slane %v1337, 1
    %v1465 = vsel %vm426, %v1462, %v1464
    %v1466 = vrot.slane %v1338, 1
    %v1467 = vsel %vm426, %v1464, %v1466
    %v1468 = vrot.slane %v1339, 1
    %v1469 = vsel %vm426, %v1466, %v1468
    %v1470 = vrot.slane %v1340, 1
    %v1471 = vsel %vm426, %v1468, %v1470
    %v1472 = vrot.slane %v1341, 1
    %v1473 = vsel %vm426, %v1470, %v1472
    %v1474 = vrot.slane %v1342, 1
    %v1475 = vsel %vm426, %v1472, %v1474
    %v1476 = vrot.slane %v1343, 1
    %v1477 = vsel %vm426, %v1474, %v1476
    %v1478 = vrot.slane %v1344, 1
    %v1479 = vsel %vm426, %v1476, %v1478
    %v1480 = vrot.slane %v1345, 1
    %v1481 = vsel %vm426, %v1478, %v1480
    %1482 = vrot.lane.b32.xlu0 %v1463, 8
    %v1483 = vpop.permute.xlu0 %1482
    %1484 = vrot.lane.b32.xlu0 %v1465, 8
    %v1485 = vpop.permute.xlu0 %1484
    %1486 = vrot.lane.b32.xlu0 %v1467, 8
    %v1487 = vpop.permute.xlu0 %1486
    %1488 = vrot.lane.b32.xlu0 %v1469, 8
    %v1489 = vpop.permute.xlu0 %1488
    %1490 = vrot.lane.b32.xlu0 %v1471, 8
    %v1491 = vpop.permute.xlu0 %1490
    %1492 = vrot.lane.b32.xlu0 %v1473, 8
    %v1493 = vpop.permute.xlu0 %1492
    %1494 = vrot.lane.b32.xlu0 %v1475, 8
    %v1495 = vpop.permute.xlu0 %1494
    %1496 = vrot.lane.b32.xlu0 %v1477, 8
    %v1497 = vpop.permute.xlu0 %1496
    %1498 = vrot.lane.b32.xlu0 %v1479, 8
    %v1499 = vpop.permute.xlu0 %1498
    %1500 = vrot.lane.b32.xlu0 %v1481, 8
    %v1501 = vpop.permute.xlu0 %1500
    %v1503 = vsel %vm175, %v1335, %v1431
    %v1505 = vsel %vm175, %v1336, %v1433
    %v1507 = vsel %vm175, %v1337, %v1435
    %v1509 = vsel %vm175, %v1338, %v1437
    %v1511 = vsel %vm175, %v1339, %v1439
    %v1513 = vsel %vm175, %v1340, %v1441
    %v1515 = vsel %vm175, %v1341, %v1443
    %v1517 = vsel %vm175, %v1342, %v1445
    %v1519 = vsel %vm175, %v1343, %v1447
    %v1521 = vsel %vm175, %v1344, %v1449
    %v1523 = vsel %vm488, %v1503, %v1483
    %v1525 = vsel %vm488, %v1505, %v1485
    %v1527 = vsel %vm488, %v1507, %v1487
    %v1529 = vsel %vm488, %v1509, %v1489
    %v1531 = vsel %vm488, %v1511, %v1491
    %v1533 = vsel %vm488, %v1513, %v1493
    %v1535 = vsel %vm488, %v1515, %v1495
    %v1537 = vsel %vm488, %v1517, %v1497
    %v1539 = vsel %vm488, %v1519, %v1499
    %v1541 = vsel %vm488, %v1521, %v1501
    %v1542 = vld [vmem:[%s3] sm:$0xf]
    %v1543 = vld [vmem:[%s3 + $0x4] sm:$0x3]
    %v1544 = vld [vmem:[%s511] sm:$0xf]
    %v1545 = vld [vmem:[%s511 + $0x4] sm:$0x3]
    %v1548 = vunpack.c.l.b16 %v1544
    %v1549 = vunpack.c.l.b16 %v1545
    %v1550 = vpack.c.b16 %v1549, %v1548
    %v1551 = vsel %vm519, %v1525, 0
    %v1553 = vsel %vm519, %v1527, 0
    %v1555 = vsel %vm519, %v1529, 0
    %v1557 = vsel %vm519, %v1531, 0
    %v1559 = vsel %vm519, %v1533, 0
    %v1561 = vsel %vm519, %v1535, 0
    %v1563 = vsel %vm519, %v1537, 0
    %v1565 = vsel %vm519, %v1539, 0
    %v1568 = vsel %vm536, %v1550, 0
    %1570 = vmatprep.subr.bf16.mxu0 0
    %1571 = vmatpush1.bf16.msra.mxu0 %v1568
    %1572 = vmatprep.subr.bf16.mxu0 0
    %1573 = vmatpush1.bf16.msra.mxu0 0
    %1574 = vmatprep.subr.bf16.mxu0 0
    %1575 = vmatpush1.bf16.msra.mxu0 0
    %1576 = vmatprep.subr.bf16.mxu0 0
    %1577 = vmatpush1.bf16.msra.mxu0 0
    %1578 = vmatprep.subr.bf16.mxu0 0
    %1579 = vmatpush1.bf16.msra.mxu0 0
    %1580 = vmatprep.subr.bf16.mxu0 0
    %1581 = vmatpush1.bf16.msra.mxu0 0
    %1582 = vmatprep.subr.bf16.mxu0 0
    %1583 = vmatpush1.bf16.msra.mxu0 0
    %1584 = vmatprep.subr.bf16.mxu0 0
    %1585 = vmatpush1.bf16.msra.mxu0 0
    %1586 = vmatprep.subr.bf16.mxu0 0
    %1587 = vmatpush1.bf16.msra.mxu0 0
    %1588 = vmatprep.subr.bf16.mxu0 0
    %1589 = vmatpush1.bf16.msra.mxu0 0
    %1590 = vmatprep.subr.bf16.mxu0 0
    %1591 = vmatpush1.bf16.msra.mxu0 0
    %1592 = vmatprep.subr.bf16.mxu0 0
    %1593 = vmatpush1.bf16.msra.mxu0 0
    %1594 = vmatprep.subr.bf16.mxu0 0
    %1595 = vmatpush1.bf16.msra.mxu0 0
    %1596 = vmatprep.subr.bf16.mxu0 0
    %1597 = vmatpush1.bf16.msra.mxu0 0
    %1598 = vmatprep.subr.bf16.mxu0 0
    %1599 = vmatpush1.bf16.msra.mxu0 0
    %1600 = vmatprep.subr.bf16.mxu0 0
    %1601 = vmatpush1.bf16.msra.mxu0 0
    %1602 = vmatprep.mubr.bf16.mxu0 0
    %1603 = vmatmul.mubr.bf16.gmra.mrb[0].mxu0 %v1551
    %v1604 = vpop.f32.mrb[0].mxu0
    %v1605 = vadd.f32 0.0, %v1604
    %v1606 = vpop.f32.mrb[0].mxu0
    %v1607 = vpop.f32.mrb[0].mxu0
    %v1608 = vadd.f32 0.0, %v1607
    %v1609 = vpop.f32.mrb[0].mxu0
    %1610 = vmatprep.mubr.bf16.mxu0 0
    %1611 = vmatmul.mubr.bf16.gmra.mrb[0].mxu0 %v1553
    %v1612 = vpop.f32.mrb[0].mxu0
    %v1613 = vadd.f32 0.0, %v1612
    %v1614 = vpop.f32.mrb[0].mxu0
    %v1615 = vpop.f32.mrb[0].mxu0
    %v1616 = vadd.f32 0.0, %v1615
    %v1617 = vpop.f32.mrb[0].mxu0
    %1618 = vmatprep.mubr.bf16.mxu0 0
    %1619 = vmatmul.mubr.bf16.gmra.mrb[0].mxu0 %v1555
    %v1620 = vpop.f32.mrb[0].mxu0
    %v1621 = vadd.f32 0.0, %v1620
    %v1622 = vpop.f32.mrb[0].mxu0
    %v1623 = vpop.f32.mrb[0].mxu0
    %v1624 = vadd.f32 0.0, %v1623
    %v1625 = vpop.f32.mrb[0].mxu0
    %1626 = vmatprep.mubr.bf16.mxu0 0
    %1627 = vmatmul.mubr.bf16.gmra.mrb[0].mxu0 %v1557
    %v1628 = vpop.f32.mrb[0].mxu0
    %v1629 = vadd.f32 0.0, %v1628
    %v1630 = vpop.f32.mrb[0].mxu0
    %v1631 = vpop.f32.mrb[0].mxu0
    %v1632 = vadd.f32 0.0, %v1631
    %v1633 = vpop.f32.mrb[0].mxu0
    %1634 = vmatprep.mubr.bf16.mxu0 0
    %1635 = vmatmul.mubr.bf16.gmra.mrb[0].mxu0 %v1559
    %v1636 = vpop.f32.mrb[0].mxu0
    %v1637 = vadd.f32 0.0, %v1636
    %v1638 = vpop.f32.mrb[0].mxu0
    %v1639 = vpop.f32.mrb[0].mxu0
    %v1640 = vadd.f32 0.0, %v1639
    %v1641 = vpop.f32.mrb[0].mxu0
    %1642 = vmatprep.mubr.bf16.mxu0 0
    %1643 = vmatmul.mubr.bf16.gmra.mrb[0].mxu0 %v1561
    %v1644 = vpop.f32.mrb[0].mxu0
    %v1645 = vadd.f32 0.0, %v1644
    %v1646 = vpop.f32.mrb[0].mxu0
    %v1647 = vpop.f32.mrb[0].mxu0
    %v1648 = vadd.f32 0.0, %v1647
    %v1649 = vpop.f32.mrb[0].mxu0
    %1650 = vmatprep.mubr.bf16.mxu0 0
    %1651 = vmatmul.mubr.bf16.gmra.mrb[0].mxu0 %v1563
    %v1652 = vpop.f32.mrb[0].mxu0
    %v1653 = vadd.f32 0.0, %v1652
    %v1654 = vpop.f32.mrb[0].mxu0
    %v1655 = vpop.f32.mrb[0].mxu0
    %v1656 = vadd.f32 0.0, %v1655
    %v1657 = vpop.f32.mrb[0].mxu0
    %1658 = vmatprep.mubr.bf16.mxu0 0
    %1659 = vmatmul.mubr.bf16.gmra.mrb[0].mxu0 %v1565
    %v1660 = vpop.f32.mrb[0].mxu0
    %v1661 = vadd.f32 0.0, %v1660
    %v1662 = vpop.f32.mrb[0].mxu0
    %v1663 = vpop.f32.mrb[0].mxu0
    %v1664 = vadd.f32 0.0, %v1663
    %v1665 = vpop.f32.mrb[0].mxu0
    %1666 = vdwg.mxu0
    %v1669 = vunpack.c.l.b16 %v1542
    %v1670 = vunpack.c.l.b16 %v1543
    %v1671 = vpack.c.b16 %v1670, %v1669
    %v1672 = vsel %vm519, %v1523, 0
    %v1675 = vsel %vm536, %v1671, 0
    %1677 = vmatprep.subr.bf16.mxu0 0
    %1678 = vmatpush1.bf16.msra.mxu0 %v1675
    %1679 = vmatprep.subr.bf16.mxu0 0
    %1680 = vmatpush1.bf16.msra.mxu0 0
    %1681 = vmatprep.subr.bf16.mxu0 0
    %1682 = vmatpush1.bf16.msra.mxu0 0
    %1683 = vmatprep.subr.bf16.mxu0 0
    %1684 = vmatpush1.bf16.msra.mxu0 0
    %1685 = vmatprep.subr.bf16.mxu0 0
    %1686 = vmatpush1.bf16.msra.mxu0 0
    %1687 = vmatprep.subr.bf16.mxu0 0
    %1688 = vmatpush1.bf16.msra.mxu0 0
    %1689 = vmatprep.subr.bf16.mxu0 0
    %1690 = vmatpush1.bf16.msra.mxu0 0
    %1691 = vmatprep.subr.bf16.mxu0 0
    %1692 = vmatpush1.bf16.msra.mxu0 0
    %1693 = vmatprep.subr.bf16.mxu0 0
    %1694 = vmatpush1.bf16.msra.mxu0 0
    %1695 = vmatprep.subr.bf16.mxu0 0
    %1696 = vmatpush1.bf16.msra.mxu0 0
    %1697 = vmatprep.subr.bf16.mxu0 0
    %1698 = vmatpush1.bf16.msra.mxu0 0
    %1699 = vmatprep.subr.bf16.mxu0 0
    %1700 = vmatpush1.bf16.msra.mxu0 0
    %1701 = vmatprep.subr.bf16.mxu0 0
    %1702 = vmatpush1.bf16.msra.mxu0 0
    %1703 = vmatprep.subr.bf16.mxu0 0
    %1704 = vmatpush1.bf16.msra.mxu0 0
    %1705 = vmatprep.subr.bf16.mxu0 0
    %1706 = vmatpush1.bf16.msra.mxu0 0
    %1707 = vmatprep.subr.bf16.mxu0 0
    %1708 = vmatpush1.bf16.msra.mxu0 0
    %1709 = vmatprep.mubr.bf16.mxu0 0
    %1710 = vmatmul.mubr.bf16.gmra.mrb[0].mxu0 %v1672
    %v1711 = vpop.f32.mrb[0].mxu0
    %v1712 = vadd.f32 %v1605, %v1711
    %v1713 = vpop.f32.mrb[0].mxu0
    %v1714 = vpop.f32.mrb[0].mxu0
    %v1715 = vadd.f32 %v1608, %v1714
    %v1716 = vpop.f32.mrb[0].mxu0
    %1717 = vmatprep.mubr.bf16.mxu0 0
    %1718 = vmatmul.mubr.bf16.gmra.mrb[0].mxu0 %v1551
    %v1719 = vpop.f32.mrb[0].mxu0
    %v1720 = vadd.f32 %v1613, %v1719
    %v1721 = vpop.f32.mrb[0].mxu0
    %v1722 = vpop.f32.mrb[0].mxu0
    %v1723 = vadd.f32 %v1616, %v1722
    %v1724 = vpop.f32.mrb[0].mxu0
    %1725 = vmatprep.mubr.bf16.mxu0 0
    %1726 = vmatmul.mubr.bf16.gmra.mrb[0].mxu0 %v1553
    %v1727 = vpop.f32.mrb[0].mxu0
    %v1728 = vadd.f32 %v1621, %v1727
    %v1729 = vpop.f32.mrb[0].mxu0
    %v1730 = vpop.f32.mrb[0].mxu0
    %v1731 = vadd.f32 %v1624, %v1730
    %v1732 = vpop.f32.mrb[0].mxu0
    %1733 = vmatprep.mubr.bf16.mxu0 0
    %1734 = vmatmul.mubr.bf16.gmra.mrb[0].mxu0 %v1555
    %v1735 = vpop.f32.mrb[0].mxu0
    %v1736 = vadd.f32 %v1629, %v1735
    %v1737 = vpop.f32.mrb[0].mxu0
    %v1738 = vpop.f32.mrb[0].mxu0
    %v1739 = vadd.f32 %v1632, %v1738
    %v1740 = vpop.f32.mrb[0].mxu0
    %1741 = vmatprep.mubr.bf16.mxu0 0
    %1742 = vmatmul.mubr.bf16.gmra.mrb[0].mxu0 %v1557
    %v1743 = vpop.f32.mrb[0].mxu0
    %v1744 = vadd.f32 %v1637, %v1743
    %v1745 = vpop.f32.mrb[0].mxu0
    %v1746 = vpop.f32.mrb[0].mxu0
    %v1747 = vadd.f32 %v1640, %v1746
    %v1748 = vpop.f32.mrb[0].mxu0
    %1749 = vmatprep.mubr.bf16.mxu0 0
    %1750 = vmatmul.mubr.bf16.gmra.mrb[0].mxu0 %v1559
    %v1751 = vpop.f32.mrb[0].mxu0
    %v1752 = vadd.f32 %v1645, %v1751
    %v1753 = vpop.f32.mrb[0].mxu0
    %v1754 = vpop.f32.mrb[0].mxu0
    %v1755 = vadd.f32 %v1648, %v1754
    %v1756 = vpop.f32.mrb[0].mxu0
    %1757 = vmatprep.mubr.bf16.mxu0 0
    %1758 = vmatmul.mubr.bf16.gmra.mrb[0].mxu0 %v1561
    %v1759 = vpop.f32.mrb[0].mxu0
    %v1760 = vadd.f32 %v1653, %v1759
    %v1761 = vpop.f32.mrb[0].mxu0
    %v1762 = vpop.f32.mrb[0].mxu0
    %v1763 = vadd.f32 %v1656, %v1762
    %v1764 = vpop.f32.mrb[0].mxu0
    %1765 = vmatprep.mubr.bf16.mxu0 0
    %1766 = vmatmul.mubr.bf16.gmra.mrb[0].mxu0 %v1563
    %v1767 = vpop.f32.mrb[0].mxu0
    %v1768 = vadd.f32 %v1661, %v1767
    %v1769 = vpop.f32.mrb[0].mxu0
    %v1770 = vpop.f32.mrb[0].mxu0
    %v1771 = vadd.f32 %v1664, %v1770
    %v1772 = vpop.f32.mrb[0].mxu0
    %1773 = vdwg.mxu0
    %v1774 = vld [vmem:[%s744] sm:$0xf]
    %v1775 = vld [vmem:[%s744 + $0x4] sm:$0x3]
    %v1778 = vunpack.c.l.b16 %v1774
    %v1779 = vunpack.c.l.b16 %v1775
    %v1780 = vpack.c.b16 %v1779, %v1778
    %v1781 = vsel %vm519, %v1541, 0
    %v1784 = vsel %vm536, %v1780, 0
    %1786 = vmatprep.subr.bf16.mxu0 0
    %1787 = vmatpush1.bf16.msra.mxu0 %v1784
    %1788 = vmatprep.subr.bf16.mxu0 0
    %1789 = vmatpush1.bf16.msra.mxu0 0
    %1790 = vmatprep.subr.bf16.mxu0 0
    %1791 = vmatpush1.bf16.msra.mxu0 0
    %1792 = vmatprep.subr.bf16.mxu0 0
    %1793 = vmatpush1.bf16.msra.mxu0 0
    %1794 = vmatprep.subr.bf16.mxu0 0
    %1795 = vmatpush1.bf16.msra.mxu0 0
    %1796 = vmatprep.subr.bf16.mxu0 0
    %1797 = vmatpush1.bf16.msra.mxu0 0
    %1798 = vmatprep.subr.bf16.mxu0 0
    %1799 = vmatpush1.bf16.msra.mxu0 0
    %1800 = vmatprep.subr.bf16.mxu0 0
    %1801 = vmatpush1.bf16.msra.mxu0 0
    %1802 = vmatprep.subr.bf16.mxu0 0
    %1803 = vmatpush1.bf16.msra.mxu0 0
    %1804 = vmatprep.subr.bf16.mxu0 0
    %1805 = vmatpush1.bf16.msra.mxu0 0
    %1806 = vmatprep.subr.bf16.mxu0 0
    %1807 = vmatpush1.bf16.msra.mxu0 0
    %1808 = vmatprep.subr.bf16.mxu0 0
    %1809 = vmatpush1.bf16.msra.mxu0 0
    %1810 = vmatprep.subr.bf16.mxu0 0
    %1811 = vmatpush1.bf16.msra.mxu0 0
    %1812 = vmatprep.subr.bf16.mxu0 0
    %1813 = vmatpush1.bf16.msra.mxu0 0
    %1814 = vmatprep.subr.bf16.mxu0 0
    %1815 = vmatpush1.bf16.msra.mxu0 0
    %1816 = vmatprep.subr.bf16.mxu0 0
    %1817 = vmatpush1.bf16.msra.mxu0 0
    %1818 = vmatprep.mubr.bf16.mxu0 0
    %1819 = vmatmul.mubr.bf16.gmra.mrb[0].mxu0 %v1553
    %v1820 = vpop.f32.mrb[0].mxu0
    %v1821 = vadd.f32 0.0, %v1820
    %v1822 = vpop.f32.mrb[0].mxu0
    %v1823 = vpop.f32.mrb[0].mxu0
    %v1824 = vadd.f32 0.0, %v1823
    %v1825 = vpop.f32.mrb[0].mxu0
    %1826 = vmatprep.mubr.bf16.mxu0 0
    %1827 = vmatmul.mubr.bf16.gmra.mrb[0].mxu0 %v1555
    %v1828 = vpop.f32.mrb[0].mxu0
    %v1829 = vadd.f32 0.0, %v1828
    %v1830 = vpop.f32.mrb[0].mxu0
    %v1831 = vpop.f32.mrb[0].mxu0
    %v1832 = vadd.f32 0.0, %v1831
    %v1833 = vpop.f32.mrb[0].mxu0
    %1834 = vmatprep.mubr.bf16.mxu0 0
    %1835 = vmatmul.mubr.bf16.gmra.mrb[0].mxu0 %v1557
    %v1836 = vpop.f32.mrb[0].mxu0
    %v1837 = vadd.f32 0.0, %v1836
    %v1838 = vpop.f32.mrb[0].mxu0
    %v1839 = vpop.f32.mrb[0].mxu0
    %v1840 = vadd.f32 0.0, %v1839
    %v1841 = vpop.f32.mrb[0].mxu0
    %1842 = vmatprep.mubr.bf16.mxu0 0
    %1843 = vmatmul.mubr.bf16.gmra.mrb[0].mxu0 %v1559
    %v1844 = vpop.f32.mrb[0].mxu0
    %v1845 = vadd.f32 0.0, %v1844
    %v1846 = vpop.f32.mrb[0].mxu0
    %v1847 = vpop.f32.mrb[0].mxu0
    %v1848 = vadd.f32 0.0, %v1847
    %v1849 = vpop.f32.mrb[0].mxu0
    %1850 = vmatprep.mubr.bf16.mxu0 0
    %1851 = vmatmul.mubr.bf16.gmra.mrb[0].mxu0 %v1561
    %v1852 = vpop.f32.mrb[0].mxu0
    %v1853 = vadd.f32 0.0, %v1852
    %v1854 = vpop.f32.mrb[0].mxu0
    %v1855 = vpop.f32.mrb[0].mxu0
    %v1856 = vadd.f32 0.0, %v1855
    %v1857 = vpop.f32.mrb[0].mxu0
    %1858 = vmatprep.mubr.bf16.mxu0 0
    %1859 = vmatmul.mubr.bf16.gmra.mrb[0].mxu0 %v1563
    %v1860 = vpop.f32.mrb[0].mxu0
    %v1861 = vadd.f32 0.0, %v1860
    %v1862 = vpop.f32.mrb[0].mxu0
    %v1863 = vpop.f32.mrb[0].mxu0
    %v1864 = vadd.f32 0.0, %v1863
    %v1865 = vpop.f32.mrb[0].mxu0
    %1866 = vmatprep.mubr.bf16.mxu0 0
    %1867 = vmatmul.mubr.bf16.gmra.mrb[0].mxu0 %v1565
    %v1868 = vpop.f32.mrb[0].mxu0
    %v1869 = vadd.f32 0.0, %v1868
    %v1870 = vpop.f32.mrb[0].mxu0
    %v1871 = vpop.f32.mrb[0].mxu0
    %v1872 = vadd.f32 0.0, %v1871
    %v1873 = vpop.f32.mrb[0].mxu0
    %1874 = vmatprep.mubr.bf16.mxu0 0
    %1875 = vmatmul.mubr.bf16.gmra.mrb[0].mxu0 %v1781
    %v1876 = vpop.f32.mrb[0].mxu0
    %v1877 = vadd.f32 0.0, %v1876
    %v1878 = vpop.f32.mrb[0].mxu0
    %v1879 = vpop.f32.mrb[0].mxu0
    %v1880 = vadd.f32 0.0, %v1879
    %v1881 = vpop.f32.mrb[0].mxu0
    %1882 = vdwg.mxu0
    %v1883 = vadd.f32 %v1712, %v1821
    %v1884 = vadd.f32 %v1715, %v1824
    %v1885 = vadd.f32 %v1720, %v1829
    %v1886 = vadd.f32 %v1723, %v1832
    %v1887 = vadd.f32 %v1728, %v1837
    %v1888 = vadd.f32 %v1731, %v1840
    %v1889 = vadd.f32 %v1736, %v1845
    %v1890 = vadd.f32 %v1739, %v1848
    %v1891 = vadd.f32 %v1744, %v1853
    %v1892 = vadd.f32 %v1747, %v1856
    %v1893 = vadd.f32 %v1752, %v1861
    %v1894 = vadd.f32 %v1755, %v1864
    %v1895 = vadd.f32 %v1760, %v1869
    %v1896 = vadd.f32 %v1763, %v1872
    %v1897 = vadd.f32 %v1768, %v1877
    %v1898 = vadd.f32 %v1771, %v1880
    %v1899 = vld [vmem:[%s4] sm:$0x1]
    %v1901 = vlaneseq
    %v1902 = vshrl.u32 %v1901, 7
    %v1903 = vsub.s32 0, %v1902
    %v1904 = vrot.slane %v1899, %v1903
    %v1906 = vadd.f32 %v1883, %v1904
    %v1907 = vadd.f32 %v1884, %v1904
    %v1908 = vadd.f32 %v1885, %v1904
    %v1909 = vadd.f32 %v1886, %v1904
    %v1910 = vadd.f32 %v1887, %v1904
    %v1911 = vadd.f32 %v1888, %v1904
    %v1912 = vadd.f32 %v1889, %v1904
    %v1913 = vadd.f32 %v1890, %v1904
    %v1914 = vadd.f32 %v1891, %v1904
    %v1915 = vadd.f32 %v1892, %v1904
    %v1916 = vadd.f32 %v1893, %v1904
    %v1917 = vadd.f32 %v1894, %v1904
    %v1918 = vadd.f32 %v1895, %v1904
    %v1919 = vadd.f32 %v1896, %v1904
    %v1920 = vadd.f32 %v1897, %v1904
    %v1921 = vadd.f32 %v1898, %v1904
    %v1922 = vmax.f32 %v1906, 0.0
    %v1923 = vmax.f32 %v1907, 0.0
    %v1924 = vmax.f32 %v1908, 0.0
    %v1925 = vmax.f32 %v1909, 0.0
    %v1926 = vmax.f32 %v1910, 0.0
    %v1927 = vmax.f32 %v1911, 0.0
    %v1928 = vmax.f32 %v1912, 0.0
    %v1929 = vmax.f32 %v1913, 0.0
    %v1930 = vmax.f32 %v1914, 0.0
    %v1931 = vmax.f32 %v1915, 0.0
    %v1932 = vmax.f32 %v1916, 0.0
    %v1933 = vmax.f32 %v1917, 0.0
    %v1934 = vmax.f32 %v1918, 0.0
    %v1935 = vmax.f32 %v1919, 0.0
    %v1936 = vmax.f32 %v1920, 0.0
    %v1937 = vmax.f32 %v1921, 0.0
    %v1938 = vpack.c.bf16 %v1923, %v1922
    %v1939 = vpack.c.bf16 %v1925, %v1924
    %v1940 = vpack.c.bf16 %v1927, %v1926
    %v1941 = vpack.c.bf16 %v1929, %v1928
    %v1942 = vpack.c.bf16 %v1931, %v1930
    %v1943 = vpack.c.bf16 %v1933, %v1932
    %v1944 = vpack.c.bf16 %v1935, %v1934
    %v1945 = vpack.c.bf16 %v1937, %v1936
    %v1946 = vld [vmem:[%s5] sm:$0x3]
    %v1947 = vld [vmem:[%s6] sm:$0x1]
    %v1949 = vlaneseq
    %v1950 = vshrl.u32 %v1949, 7
    %v1951 = vsub.s32 0, %v1950
    %v1952 = vrot.slane %v1947, %v1951
    %v1962 = vunpack.c.l.b16 %v1938
    %v1963 = vunpack.c.l.b16 %v1939
    %v1964 = vunpack.c.l.b16 %v1940
    %v1965 = vunpack.c.l.b16 %v1941
    %v1966 = vunpack.c.l.b16 %v1942
    %v1967 = vunpack.c.l.b16 %v1943
    %v1968 = vunpack.c.l.b16 %v1944
    %v1969 = vunpack.c.l.b16 %v1945
    %v1970 = vpack.c.b16 %v1963, %v1962
    %v1971 = vpack.c.b16 %v1965, %v1964
    %v1972 = vpack.c.b16 %v1967, %v1966
    %v1973 = vpack.c.b16 %v1969, %v1968
    %v1975 = vsel %vm175, %v1970, 0
    %v1978 = vsel %vm175, %v1971, 0
    %v1981 = vsel %vm175, %v1972, 0
    %v1984 = vsel %vm175, %v1973, 0
    %v1987 = vsel %vm957, %v1946, 0
    %1989 = vmatprep.subr.bf16.mxu0 0
    %1990 = vmatpush1.bf16.msra.mxu0 %v1987
    %1991 = vmatprep.subr.bf16.mxu0 0
    %1992 = vmatpush1.bf16.msra.mxu0 0
    %1993 = vmatprep.subr.bf16.mxu0 0
    %1994 = vmatpush1.bf16.msra.mxu0 0
    %1995 = vmatprep.subr.bf16.mxu0 0
    %1996 = vmatpush1.bf16.msra.mxu0 0
    %1997 = vmatprep.subr.bf16.mxu0 0
    %1998 = vmatpush1.bf16.msra.mxu0 0
    %1999 = vmatprep.subr.bf16.mxu0 0
    %2000 = vmatpush1.bf16.msra.mxu0 0
    %2001 = vmatprep.subr.bf16.mxu0 0
    %2002 = vmatpush1.bf16.msra.mxu0 0
    %2003 = vmatprep.subr.bf16.mxu0 0
    %2004 = vmatpush1.bf16.msra.mxu0 0
    %2005 = vmatprep.subr.bf16.mxu0 0
    %2006 = vmatpush1.bf16.msra.mxu0 0
    %2007 = vmatprep.subr.bf16.mxu0 0
    %2008 = vmatpush1.bf16.msra.mxu0 0
    %2009 = vmatprep.subr.bf16.mxu0 0
    %2010 = vmatpush1.bf16.msra.mxu0 0
    %2011 = vmatprep.subr.bf16.mxu0 0
    %2012 = vmatpush1.bf16.msra.mxu0 0
    %2013 = vmatprep.subr.bf16.mxu0 0
    %2014 = vmatpush1.bf16.msra.mxu0 0
    %2015 = vmatprep.subr.bf16.mxu0 0
    %2016 = vmatpush1.bf16.msra.mxu0 0
    %2017 = vmatprep.subr.bf16.mxu0 0
    %2018 = vmatpush1.bf16.msra.mxu0 0
    %2019 = vmatprep.subr.bf16.mxu0 0
    %2020 = vmatpush1.bf16.msra.mxu0 0
    %2021 = vmatprep.mubr.bf16.mxu0 0
    %2022 = vmatmul.mubr.bf16.gmra.mrb[0].mxu0 %v1975
    %v2023 = vpop.f32.mrb[0].mxu0
    %v2024 = vadd.f32 %v1952, %v2023
    %v2025 = vpop.f32.mrb[0].mxu0
    %v2026 = vpop.f32.mrb[0].mxu0
    %v2027 = vadd.f32 %v1952, %v2026
    %v2028 = vpop.f32.mrb[0].mxu0
    %2029 = vmatprep.mubr.bf16.mxu0 0
    %2030 = vmatmul.mubr.bf16.gmra.mrb[0].mxu0 %v1978
    %v2031 = vpop.f32.mrb[0].mxu0
    %v2032 = vadd.f32 %v1952, %v2031
    %v2033 = vpop.f32.mrb[0].mxu0
    %v2034 = vpop.f32.mrb[0].mxu0
    %v2035 = vadd.f32 %v1952, %v2034
    %v2036 = vpop.f32.mrb[0].mxu0
    %2037 = vmatprep.mubr.bf16.mxu0 0
    %2038 = vmatmul.mubr.bf16.gmra.mrb[0].mxu0 %v1981
    %v2039 = vpop.f32.mrb[0].mxu0
    %v2040 = vadd.f32 %v1952, %v2039
    %v2041 = vpop.f32.mrb[0].mxu0
    %v2042 = vpop.f32.mrb[0].mxu0
    %v2043 = vadd.f32 %v1952, %v2042
    %v2044 = vpop.f32.mrb[0].mxu0
    %2045 = vmatprep.mubr.bf16.mxu0 0
    %2046 = vmatmul.mubr.bf16.gmra.mrb[0].mxu0 %v1984
    %v2047 = vpop.f32.mrb[0].mxu0
    %v2048 = vadd.f32 %v1952, %v2047
    %v2049 = vpop.f32.mrb[0].mxu0
    %v2050 = vpop.f32.mrb[0].mxu0
    %v2051 = vadd.f32 %v1952, %v2050
    %v2052 = vpop.f32.mrb[0].mxu0
    %2053 = vdwg.mxu0
    %v2054 = vpack.c.bf16 %v2027, %v2024
    %v2055 = vpack.c.bf16 %v2035, %v2032
    %v2056 = vpack.c.bf16 %v2043, %v2040
    %v2057 = vpack.c.bf16 %v2051, %v2048
    %v2062 = vunpack.c.l.b16 %v2054
    %v2063 = vunpack.c.h.b16 %v2054
    %v2064 = vunpack.c.l.b16 %v2055
    %v2065 = vunpack.c.h.b16 %v2055
    %v2066 = vunpack.c.l.b16 %v2056
    %v2067 = vunpack.c.h.b16 %v2056
    %v2068 = vunpack.c.l.b16 %v2057
    %v2069 = vunpack.c.h.b16 %v2057
    %v2070 = vpack.c.b16 %v2062, %v2062
    %v2071 = vpack.c.b16 %v2063, %v2063
    %v2072 = vpack.c.b16 %v2064, %v2064
    %v2073 = vpack.c.b16 %v2065, %v2065
    %v2074 = vpack.c.b16 %v2066, %v2066
    %v2075 = vpack.c.b16 %v2067, %v2067
    %v2076 = vpack.c.b16 %v2068, %v2068
    %v2077 = vpack.c.b16 %v2069, %v2069
    %v2086 = vadd.bf16 %v2070, %v1084
    %v2087 = vadd.bf16 %v2071, %v1085
    %v2088 = vadd.bf16 %v2072, %v1086
    %v2089 = vadd.bf16 %v2073, %v1087
    %v2090 = vadd.bf16 %v2074, %v1088
    %v2091 = vadd.bf16 %v2075, %v1089
    %v2092 = vadd.bf16 %v2076, %v1090
    %v2093 = vadd.bf16 %v2077, %v1091
    %v2094 = vmax.bf16 %v2086, 0
    %v2095 = vmax.bf16 %v2087, 0
    %v2096 = vmax.bf16 %v2088, 0
    %v2097 = vmax.bf16 %v2089, 0
    %v2098 = vmax.bf16 %v2090, 0
    %v2099 = vmax.bf16 %v2091, 0
    %v2100 = vmax.bf16 %v2092, 0
    %v2101 = vmax.bf16 %v2093, 0
    %s2102 = scalar_lea.vmem [#allocation6], 32
    %2103 = vst.msk [vmem:[%s2102] sm:$0xf] %vm1074, %v2094
    %2104 = vst.msk [vmem:[%s2102 + $0x4] sm:$0xf] %vm1074, %v2095
    %2105 = vst.msk [vmem:[%s2102 + $0x8] sm:$0xf] %vm1074, %v2096
    %2106 = vst.msk [vmem:[%s2102 + $0xc] sm:$0xf] %vm1074, %v2097
    %2107 = vst.msk [vmem:[%s2102 + $0x10] sm:$0xf] %vm1074, %v2098
    %2108 = vst.msk [vmem:[%s2102 + $0x14] sm:$0xf] %vm1074, %v2099
    %2109 = vst.msk [vmem:[%s2102 + $0x18] sm:$0xf] %vm1074, %v2100
    %2110 = vst.msk [vmem:[%s2102 + $0x1c] sm:$0xf] %vm1074, %v2101
    // Predicated region
    $region34: #{tpu_custom_call.1} parent=1 // pred_check
      _
    $region35: #{tpu_custom_call.1} parent=1 // pred_check_branch
      %2112 = sbr.rel (0) target = $region37
    $region36: #{tpu_custom_call.1} parent=1 // pred_region
      %s2114 = ssub.s32 1024, 1024
      %2115 = vsyncadd [#allocation5], %s2114
      %s2116 = sshll.u32 [#allocation6], 4
      %s2117 = int_to_ptr.vmem [resolvable:$true] %s2116
      %2122 = dma.vmem_to_hbm [thread:$0]  %s2117, 1024, %s7, [#allocation5], 64, 64, 4
    $region37: #{tpu_custom_call.1} parent=1 // pred_fallthru
      _
    // Predicated region
    $region38: #{tpu_custom_call.1} parent=1 // pred_check
      _
    $region39: #{tpu_custom_call.1} parent=1 // pred_check_branch
      %2124 = sbr.rel (0) target = $region41
    $region40: #{tpu_custom_call.1} parent=1 // pred_region
      %2125 = dma.done [#allocation5], 1024
    $region41: #{tpu_custom_call.1} parent=1 // pred_fallthru
      _
    %2126 = vsyncpa [#allocation4], 1
    %2127 = vsyncpa [#allocation5], 1

</llo_original>
